<compile_context>
chip_gen: v7x
topology: tpu7x:2x2x1
jax: 0.10.0
libtpu: 0.0.40
codegen_flags: <defaults>
</compile_context>

<pallas_src>
import functools

import jax
import jax.numpy as jnp
from jax.experimental import pallas as pl
from jax.experimental.pallas import tpu as pltpu

HIDDEN = 200
HIDDEN_PAD = 256   # hidden 200 zero-padded to a full 256-lane MXU tile
LANE = 128         # TPU lane width; the batch tile is now the lane axis


def _round_up(x, m):
    return (x + m - 1) // m * m


def _leaky_relu(x, slope=0.2):
    # Python-float slope keeps the op in x.dtype (bf16 or f32).
    return jnp.where(x > 0, x, slope * x)


def qvalue_kernel(sT_ref, aT_ref, w1sT_ref, w1aT_ref, b1_ref, w2T_ref, b2_ref,
                  w3r_ref, o_ref):
    """Feature-major forward: all activations are (features, batch_tile)."""
    wdt = w1sT_ref.dtype
    sT = sT_ref[...].astype(wdt)
    aT = aT_ref[...].astype(wdt)

    # fc1, split over the concat boundary: (256,S)@(S,TB) + (256,A)@(A,TB).
    # f32 MXU accumulation, then bias + leaky_relu in the weight dtype.
    h1 = (jnp.dot(w1sT_ref[...], sT, preferred_element_type=jnp.float32)
          + jnp.dot(w1aT_ref[...], aT, preferred_element_type=jnp.float32))
    h1 = _leaky_relu(h1.astype(wdt) + b1_ref[...])

    # fc2: (256,256)@(256,TB)
    h2 = jnp.dot(w2T_ref[...], h1, preferred_element_type=jnp.float32)
    h2 = _leaky_relu(h2.astype(wdt) + b2_ref[...])

    # out: (1,256)@(256,TB) -> lane-dense (1,TB); scalar bias added in wrapper.
    o_ref[...] = jnp.dot(w3r_ref[...], h2, preferred_element_type=jnp.float32)


def prep_params(params, state_dim, weight_dtype=jnp.bfloat16):
    """Transpose to feature-major, split w1 at the state/action boundary and
    zero-pad hidden 200 -> 256.

    `params` holds the logical (unpadded) weights:
      w1 (state+action, 200), b1 (1, 200), w2 (200, 200), b2 (1, 200),
      w3 (200, 1), b3 (1, 1).
    """
    w1, b1 = params["w1"], params["b1"]
    w2, b2 = params["w2"], params["b2"]
    w3, b3 = params["w3"], params["b3"]
    hp = HIDDEN_PAD - HIDDEN

    w1p = jnp.pad(w1, ((0, 0), (0, hp)))          # (in_dim, 256)
    w1sT = w1p[:state_dim].T                      # (256, state_dim)
    w1aT = w1p[state_dim:].T                      # (256, action_dim)
    b1c = jnp.pad(b1, ((0, 0), (0, hp))).T        # (256, 1)
    w2T = jnp.pad(w2, ((0, hp), (0, hp))).T       # (256, 256)
    b2c = jnp.pad(b2, ((0, 0), (0, hp))).T        # (256, 1)
    w3r = jnp.pad(w3, ((0, hp), (0, 0))).T        # (1, 256)
    return {
        "w1sT": w1sT.astype(weight_dtype),
        "w1aT": w1aT.astype(weight_dtype),
        "b1": b1c.astype(weight_dtype),
        "w2T": w2T.astype(weight_dtype),
        "b2": b2c.astype(weight_dtype),
        "w3r": w3r.astype(weight_dtype),
        "b3": b3.astype(jnp.float32),
    }


@functools.partial(jax.jit, static_argnames=("tb",))
def qvalue_forward(s, a, prepped, *, tb=4096):
    """Pallas forward for QValueFunction.

    s: (B, state_dim), a: (B, action_dim), prepped: output of prep_params.
    Returns (B, 1) f32.
    """
    B, state_dim = s.shape
    action_dim = a.shape[1]
    in_dim = state_dim + action_dim

    # Batch tile is the lane axis of every block -> multiple of 128.  Cap it
    # so big batches get >= 2 grid steps (shards across v7x's 2 TensorCores).
    bp_min = _round_up(B, LANE)
    TB = min(_round_up(tb, LANE), bp_min)
    if bp_min >= 2 * LANE:
        TB = min(TB, _round_up(-(-bp_min // 2), LANE))
    Bp = _round_up(B, TB)

    sT = jnp.pad(s.astype(jnp.float32).T, ((0, 0), (0, Bp - B)))
    aT = jnp.pad(a.astype(jnp.float32).T, ((0, 0), (0, Bp - B)))

    w1sT, w1aT = prepped["w1sT"], prepped["w1aT"]
    b1, w2T, b2 = prepped["b1"], prepped["w2T"], prepped["b2"]
    w3r, b3 = prepped["w3r"], prepped["b3"]

    stream = lambda feat: pl.BlockSpec((feat, TB), lambda i: (0, i))
    resident = lambda arr: pl.BlockSpec(arr.shape, lambda i: (0, 0))

    def _nbytes(x):
        n = 1
        for d in x.shape:
            n *= d
        return n * x.dtype.itemsize

    weight_bytes = sum(_nbytes(w) for w in (w1sT, w1aT, b1, w2T, b2, w3r))
    cost = pl.CostEstimate(
        flops=2 * Bp * (in_dim * HIDDEN_PAD + HIDDEN_PAD * HIDDEN_PAD
                        + HIDDEN_PAD),
        transcendentals=0,
        bytes_accessed=Bp * (in_dim + 1) * 4 + weight_bytes)

    out = pl.pallas_call(
        qvalue_kernel,
        out_shape=jax.ShapeDtypeStruct((1, Bp), jnp.float32),
        grid=(Bp // TB,),
        in_specs=[
            stream(state_dim),    # s^T tile
            stream(action_dim),   # a^T tile
            resident(w1sT), resident(w1aT), resident(b1),
            resident(w2T), resident(b2), resident(w3r),
        ],
        out_specs=pl.BlockSpec((1, TB), lambda i: (0, i)),
        compiler_params=pltpu.CompilerParams(
            dimension_semantics=("parallel",),
            vmem_limit_bytes=32 * 1024 * 1024),
        cost_estimate=cost,
    )(sT, aT, w1sT, w1aT, b1, w2T, b2, w3r)

    # Scalar output bias folded here (keeps the kernel epilogue lane-dense).
    return out[0, :B][:, None] + b3


def init_params(key, state_dim, action_dim, hidden=HIDDEN):
    """PyTorch nn.Linear-style init: U(-1/sqrt(fan_in), 1/sqrt(fan_in))."""
    in_dim = state_dim + action_dim
    ks = jax.random.split(key, 6)

    def uniform(k, shape, fan_in):
        bound = 1.0 / jnp.sqrt(fan_in)
        return jax.random.uniform(k, shape, jnp.float32, -bound, bound)

    return {
        "w1": uniform(ks[0], (in_dim, hidden), in_dim),
        "b1": uniform(ks[1], (1, hidden), in_dim),
        "w2": uniform(ks[2], (hidden, hidden), hidden),
        "b2": uniform(ks[3], (1, hidden), hidden),
        "w3": uniform(ks[4], (hidden, 1), hidden),
        "b3": uniform(ks[5], (1, 1), hidden),
    }


def qvalue_reference(s, a, params):
    """Pure-JAX reference (unpadded, f32) for correctness check."""
    x = jnp.concatenate([s, a], axis=1)
    h1 = jax.nn.leaky_relu(x @ params["w1"] + params["b1"], 0.2)
    h2 = jax.nn.leaky_relu(h1 @ params["w2"] + params["b2"], 0.2)
    return h2 @ params["w3"] + params["b3"]


if __name__ == "__main__":
    key = jax.random.PRNGKey(0)
    k_param, k_s, k_a, k_s2, k_a2 = jax.random.split(key, 5)

    batch, state_dim, action_dim = 8, 16, 8

    params = init_params(k_param, state_dim, action_dim)
    s = jax.random.normal(k_s, (batch, state_dim), jnp.float32)
    a = jax.random.normal(k_a, (batch, action_dim), jnp.float32)
    ref = qvalue_reference(s, a, params)

    # f32-weight path: exact check against the pure-JAX reference.
    prepped_f32 = prep_params(params, state_dim, weight_dtype=jnp.float32)
    out_f32 = jax.block_until_ready(qvalue_forward(s, a, prepped_f32))
    assert out_f32.shape == (batch, 1)
    assert jnp.allclose(out_f32, ref, atol=1e-4, rtol=1e-4)

    # Default bf16-weight path (bf16 MXU operands, f32 accumulation): looser tol.
    prepped_bf16 = prep_params(params, state_dim)
    out_bf16 = jax.block_until_ready(qvalue_forward(s, a, prepped_bf16))
    assert out_bf16.shape == (batch, 1)
    assert jnp.allclose(out_bf16, ref, atol=5e-2, rtol=5e-2)

    # Exercise the padded-batch path (B not a multiple of the 128-lane tile).
    batch2 = 37
    s2 = jax.random.normal(k_s2, (batch2, state_dim), jnp.float32)
    a2 = jax.random.normal(k_a2, (batch2, action_dim), jnp.float32)
    out2 = jax.block_until_ready(qvalue_forward(s2, a2, prepped_f32))
    ref2 = qvalue_reference(s2, a2, params)
    assert out2.shape == (batch2, 1)
    assert jnp.allclose(out2, ref2, atol=1e-4, rtol=1e-4)

    print("KERNEL_OK")
</pallas_src>

<mosaic_0001>
module attributes {stable_mosaic.version = 11 : i64} {
  func.func @qvalue_kernel(%arg0: i32, %arg1: memref<16x128xf32, #tpu.memory_space<vmem>>, %arg2: memref<8x128xf32, #tpu.memory_space<vmem>>, %arg3: memref<256x16xf32, #tpu.memory_space<vmem>>, %arg4: memref<256x8xf32, #tpu.memory_space<vmem>>, %arg5: memref<256x1xf32, #tpu.memory_space<vmem>>, %arg6: memref<256x256xf32, #tpu.memory_space<vmem>>, %arg7: memref<256x1xf32, #tpu.memory_space<vmem>>, %arg8: memref<1x256xf32, #tpu.memory_space<vmem>>, %arg9: memref<1x128xf32, #tpu.memory_space<vmem>>) attributes {dimension_semantics = [#tpu.dimension_semantics<parallel>], iteration_bounds = array<i64: 1>, scalar_prefetch = 0 : i64, scratch_operands = 0 : i64, tpu.core_type = #tpu.core_type<tc>, window_params = [{transform_indices = @transform_0, window_bounds = array<i64: 16, 128>}, {transform_indices = @transform_1, window_bounds = array<i64: 8, 128>}, {pipeline_mode = #tpu.pipeline_mode<synchronous>, transform_indices = @transform_2, window_bounds = array<i64: 256, 16>}, {pipeline_mode = #tpu.pipeline_mode<synchronous>, transform_indices = @transform_3, window_bounds = array<i64: 256, 8>}, {pipeline_mode = #tpu.pipeline_mode<synchronous>, transform_indices = @transform_4, window_bounds = array<i64: 256, 1>}, {pipeline_mode = #tpu.pipeline_mode<synchronous>, transform_indices = @transform_5, window_bounds = array<i64: 256, 256>}, {pipeline_mode = #tpu.pipeline_mode<synchronous>, transform_indices = @transform_6, window_bounds = array<i64: 256, 1>}, {pipeline_mode = #tpu.pipeline_mode<synchronous>, transform_indices = @transform_7, window_bounds = array<i64: 1, 256>}, {transform_indices = @transform_8, window_bounds = array<i64: 1, 128>}]} {
    %c0 = arith.constant 0 : index
    %c0_0 = arith.constant 0 : index
    %0 = vector.load %arg1[%c0, %c0_0] : memref<16x128xf32, #tpu.memory_space<vmem>>, vector<16x128xf32>
    %c0_1 = arith.constant 0 : index
    %c0_2 = arith.constant 0 : index
    %1 = vector.load %arg2[%c0_1, %c0_2] : memref<8x128xf32, #tpu.memory_space<vmem>>, vector<8x128xf32>
    %c0_3 = arith.constant 0 : index
    %c0_4 = arith.constant 0 : index
    %2 = vector.load %arg3[%c0_3, %c0_4] : memref<256x16xf32, #tpu.memory_space<vmem>>, vector<256x16xf32>
    %cst = arith.constant dense<0.000000e+00> : vector<256x128xf32>
    %3 = tpu.matmul %2, %0, %cst {dimension_numbers = #tpu.dot_dimension_numbers<[1], [0], [0], [1], [0, 0, 1, 1], [], []>} : vector<256x16xf32>, vector<16x128xf32>, vector<256x128xf32> -> vector<256x128xf32>
    %c0_5 = arith.constant 0 : index
    %c0_6 = arith.constant 0 : index
    %4 = vector.load %arg4[%c0_5, %c0_6] : memref<256x8xf32, #tpu.memory_space<vmem>>, vector<256x8xf32>
    %cst_7 = arith.constant dense<0.000000e+00> : vector<256x128xf32>
    %5 = tpu.matmul %4, %1, %cst_7 {dimension_numbers = #tpu.dot_dimension_numbers<[1], [0], [0], [1], [0, 0, 1, 1], [], []>} : vector<256x8xf32>, vector<8x128xf32>, vector<256x128xf32> -> vector<256x128xf32>
    %6 = arith.addf %3, %5 : vector<256x128xf32>
    %c0_8 = arith.constant 0 : index
    %c0_9 = arith.constant 0 : index
    %7 = vector.load %arg5[%c0_8, %c0_9] : memref<256x1xf32, #tpu.memory_space<vmem>>, vector<256x1xf32>
    %8 = vector.broadcast %7 : vector<256x1xf32> to vector<256x128xf32>
    %9 = arith.addf %6, %8 : vector<256x128xf32>
    %cst_10 = arith.constant 0.000000e+00 : f32
    %10 = vector.broadcast %cst_10 : f32 to vector<256x128xf32>
    %11 = arith.cmpf ogt, %9, %10 : vector<256x128xf32>
    %cst_11 = arith.constant 2.000000e-01 : f32
    %12 = vector.broadcast %cst_11 : f32 to vector<256x128xf32>
    %13 = arith.mulf %12, %9 : vector<256x128xf32>
    %14 = arith.select %11, %9, %13 : vector<256x128xi1>, vector<256x128xf32>
    %c0_12 = arith.constant 0 : index
    %c0_13 = arith.constant 0 : index
    %15 = vector.load %arg6[%c0_12, %c0_13] : memref<256x256xf32, #tpu.memory_space<vmem>>, vector<256x256xf32>
    %cst_14 = arith.constant dense<0.000000e+00> : vector<256x128xf32>
    %16 = tpu.matmul %15, %14, %cst_14 {dimension_numbers = #tpu.dot_dimension_numbers<[1], [0], [0], [1], [0, 0, 1, 1], [], []>} : vector<256x256xf32>, vector<256x128xf32>, vector<256x128xf32> -> vector<256x128xf32>
    %c0_15 = arith.constant 0 : index
    %c0_16 = arith.constant 0 : index
    %17 = vector.load %arg7[%c0_15, %c0_16] : memref<256x1xf32, #tpu.memory_space<vmem>>, vector<256x1xf32>
    %18 = vector.broadcast %17 : vector<256x1xf32> to vector<256x128xf32>
    %19 = arith.addf %16, %18 : vector<256x128xf32>
    %cst_17 = arith.constant 0.000000e+00 : f32
    %20 = vector.broadcast %cst_17 : f32 to vector<256x128xf32>
    %21 = arith.cmpf ogt, %19, %20 : vector<256x128xf32>
    %cst_18 = arith.constant 2.000000e-01 : f32
    %22 = vector.broadcast %cst_18 : f32 to vector<256x128xf32>
    %23 = arith.mulf %22, %19 : vector<256x128xf32>
    %24 = arith.select %21, %19, %23 : vector<256x128xi1>, vector<256x128xf32>
    %c0_19 = arith.constant 0 : index
    %c0_20 = arith.constant 0 : index
    %25 = vector.load %arg8[%c0_19, %c0_20] : memref<1x256xf32, #tpu.memory_space<vmem>>, vector<1x256xf32>
    %cst_21 = arith.constant dense<0.000000e+00> : vector<1x128xf32>
    %26 = tpu.matmul %25, %24, %cst_21 {dimension_numbers = #tpu.dot_dimension_numbers<[1], [0], [0], [1], [0, 0, 1, 1], [], []>} : vector<1x256xf32>, vector<256x128xf32>, vector<1x128xf32> -> vector<1x128xf32>
    %c0_22 = arith.constant 0 : index
    %c0_23 = arith.constant 0 : index
    %27 = vector.load %arg9[%c0_22, %c0_23] : memref<1x128xf32, #tpu.memory_space<vmem>>, vector<1x128xf32>
    tpu.vector_store %arg9[%c0_22, %c0_23], %26 {strides = array<i32>} : memref<1x128xf32, #tpu.memory_space<vmem>>, vector<1x128xf32>,
    return
  }
  func.func @transform_0(%arg0: i32) -> (i32, i32) {
    %c0_i32 = arith.constant 0 : i32
    %c0_i32_0 = arith.constant 0 : i32
    return %c0_i32, %arg0 : i32, i32
  }
  func.func @transform_1(%arg0: i32) -> (i32, i32) {
    %c0_i32 = arith.constant 0 : i32
    %c0_i32_0 = arith.constant 0 : i32
    return %c0_i32, %arg0 : i32, i32
  }
  func.func @transform_2(%arg0: i32) -> (i32, i32) {
    %c0_i32 = arith.constant 0 : i32
    %c0_i32_0 = arith.constant 0 : i32
    %c0_i32_1 = arith.constant 0 : i32
    return %c0_i32, %c0_i32_0 : i32, i32
  }
  func.func @transform_3(%arg0: i32) -> (i32, i32) {
    %c0_i32 = arith.constant 0 : i32
    %c0_i32_0 = arith.constant 0 : i32
    %c0_i32_1 = arith.constant 0 : i32
    return %c0_i32, %c0_i32_0 : i32, i32
  }
  func.func @transform_4(%arg0: i32) -> (i32, i32) {
    %c0_i32 = arith.constant 0 : i32
    %c0_i32_0 = arith.constant 0 : i32
    %c0_i32_1 = arith.constant 0 : i32
    return %c0_i32, %c0_i32_0 : i32, i32
  }
  func.func @transform_5(%arg0: i32) -> (i32, i32) {
    %c0_i32 = arith.constant 0 : i32
    %c0_i32_0 = arith.constant 0 : i32
    %c0_i32_1 = arith.constant 0 : i32
    return %c0_i32, %c0_i32_0 : i32, i32
  }
  func.func @transform_6(%arg0: i32) -> (i32, i32) {
    %c0_i32 = arith.constant 0 : i32
    %c0_i32_0 = arith.constant 0 : i32
    %c0_i32_1 = arith.constant 0 : i32
    return %c0_i32, %c0_i32_0 : i32, i32
  }
  func.func @transform_7(%arg0: i32) -> (i32, i32) {
    %c0_i32 = arith.constant 0 : i32
    %c0_i32_0 = arith.constant 0 : i32
    %c0_i32_1 = arith.constant 0 : i32
    return %c0_i32, %c0_i32_0 : i32, i32
  }
  func.func @transform_8(%arg0: i32) -> (i32, i32) {
    %c0_i32 = arith.constant 0 : i32
    %c0_i32_0 = arith.constant 0 : i32
    return %c0_i32, %arg0 : i32, i32
  }
}

</mosaic_0001>

<llo_original>
// kernel: qvalue_forward.1
$region0: #{qvalue_forward.1}
  #allocation0 [shape = 'u32[]', space=smem, size = 0x4, offset = 0x4, fixed_abs, tag = 'smem constant byte address 0x4 - core index']
  #allocation1 [shape = 'u32[144,128]{1,0:T(1,128)}', space=vmem, size = 0x12000, scoped, tag = 'internal scratch']
  %s0 = inlined_call_operand.vmem [shape: f32[16,128], index: 0, kind: input, shape index: {}]
  %s1 = inlined_call_operand.vmem [shape: f32[8,128], index: 1, kind: input, shape index: {}]
  %s2 = inlined_call_operand.vmem [shape: f32[256,16], index: 2, kind: input, shape index: {}]
  %s3 = inlined_call_operand.vmem [shape: f32[256,8], index: 3, kind: input, shape index: {}]
  %s4 = inlined_call_operand.vmem [shape: f32[256,1], index: 4, kind: input, shape index: {}]
  %s5 = inlined_call_operand.vmem [shape: f32[256,256], index: 5, kind: input, shape index: {}]
  %s6 = inlined_call_operand.vmem [shape: f32[256,1], index: 6, kind: input, shape index: {}]
  %s7 = inlined_call_operand.vmem [shape: f32[1,256], index: 7, kind: input, shape index: {}]
  %s8 = inlined_call_operand.vmem [shape: f32[1,128], index: 8, kind: output, shape index: {}]
  %s9 = sld [smem:[#allocation0]]
  $region42: #{qvalue_forward.1} parent=0
    _
  %s11 = ssub.s32 1, %s9
  %s12 = scalar_select 0, %s11, %s9
  // Predicated region
  $region2: #{qvalue_forward.1} parent=0 // pred_check
    _
  $region3: #{qvalue_forward.1} parent=0 // pred_check_branch
    %14 = sbr.rel (0) target = $region5
  $region4: #{qvalue_forward.1} parent=0 // pred_region
    _
  $region5: #{qvalue_forward.1} parent=0 // pred_fallthru
    _
  // Predicated region
  $region6: #{qvalue_forward.1} parent=0 // pred_check
    _
  $region7: #{qvalue_forward.1} parent=0 // pred_check_branch
    %16 = sbr.rel (0) target = $region9
  $region8: #{qvalue_forward.1} parent=0 // pred_region
    _
  $region9: #{qvalue_forward.1} parent=0 // pred_fallthru
    _
  // Predicated region
  $region10: #{qvalue_forward.1} parent=0 // pred_check
    _
  $region11: #{qvalue_forward.1} parent=0 // pred_check_branch
    %18 = sbr.rel (0) target = $region13
  $region12: #{qvalue_forward.1} parent=0 // pred_region
    _
  $region13: #{qvalue_forward.1} parent=0 // pred_fallthru
    _
  // Predicated region
  $region14: #{qvalue_forward.1} parent=0 // pred_check
    _
  $region15: #{qvalue_forward.1} parent=0 // pred_check_branch
    %20 = sbr.rel (0) target = $region17
  $region16: #{qvalue_forward.1} parent=0 // pred_region
    _
  $region17: #{qvalue_forward.1} parent=0 // pred_fallthru
    _
  // Predicated region
  $region18: #{qvalue_forward.1} parent=0 // pred_check
    _
  $region19: #{qvalue_forward.1} parent=0 // pred_check_branch
    %22 = sbr.rel (0) target = $region21
  $region20: #{qvalue_forward.1} parent=0 // pred_region
    _
  $region21: #{qvalue_forward.1} parent=0 // pred_fallthru
    _
  // Predicated region
  $region22: #{qvalue_forward.1} parent=0 // pred_check
    _
  $region23: #{qvalue_forward.1} parent=0 // pred_check_branch
    %24 = sbr.rel (0) target = $region25
  $region24: #{qvalue_forward.1} parent=0 // pred_region
    _
  $region25: #{qvalue_forward.1} parent=0 // pred_fallthru
    _
  // Predicated region
  $region26: #{qvalue_forward.1} parent=0 // pred_check
    _
  $region27: #{qvalue_forward.1} parent=0 // pred_check_branch
    %26 = sbr.rel (0) target = $region29
  $region28: #{qvalue_forward.1} parent=0 // pred_region
    _
  $region29: #{qvalue_forward.1} parent=0 // pred_fallthru
    _
  // Predicated region
  $region30: #{qvalue_forward.1} parent=0 // pred_check
    _
  $region31: #{qvalue_forward.1} parent=0 // pred_check_branch
    %28 = sbr.rel (0) target = $region33
  $region32: #{qvalue_forward.1} parent=0 // pred_region
    _
  $region33: #{qvalue_forward.1} parent=0 // pred_fallthru
    _
  %v29 = vld [vmem:[%s0] sm:$0xff]
  %v30 = vld [vmem:[%s0 + $0x8] sm:$0xff]
  %v31 = vld [vmem:[%s1] sm:$0xff]
  %v32 = vld [vmem:[%s2] sm:$0xff]
  %v33 = vld [vmem:[%s2 + $0x8] sm:$0xff]
  %v34 = vld [vmem:[%s2 + $0x10] sm:$0xff]
  %v35 = vld [vmem:[%s2 + $0x18] sm:$0xff]
  %v36 = vld [vmem:[%s2 + $0x20] sm:$0xff]
  %v37 = vld [vmem:[%s2 + $0x28] sm:$0xff]
  %v38 = vld [vmem:[%s2 + $0x30] sm:$0xff]
  %v39 = vld [vmem:[%s2 + $0x38] sm:$0xff]
  %v40 = vld [vmem:[%s2 + $0x40] sm:$0xff]
  %v41 = vld [vmem:[%s2 + $0x48] sm:$0xff]
  %v42 = vld [vmem:[%s2 + $0x50] sm:$0xff]
  %v43 = vld [vmem:[%s2 + $0x58] sm:$0xff]
  %v44 = vld [vmem:[%s2 + $0x60] sm:$0xff]
  %v45 = vld [vmem:[%s2 + $0x68] sm:$0xff]
  %v46 = vld [vmem:[%s2 + $0x70] sm:$0xff]
  %v47 = vld [vmem:[%s2 + $0x78] sm:$0xff]
  %v48 = vld [vmem:[%s2 + $0x80] sm:$0xff]
  %v49 = vld [vmem:[%s2 + $0x88] sm:$0xff]
  %v50 = vld [vmem:[%s2 + $0x90] sm:$0xff]
  %v51 = vld [vmem:[%s2 + $0x98] sm:$0xff]
  %v52 = vld [vmem:[%s2 + $0xa0] sm:$0xff]
  %v53 = vld [vmem:[%s2 + $0xa8] sm:$0xff]
  %v54 = vld [vmem:[%s2 + $0xb0] sm:$0xff]
  %v55 = vld [vmem:[%s2 + $0xb8] sm:$0xff]
  %v56 = vld [vmem:[%s2 + $0xc0] sm:$0xff]
  %v57 = vld [vmem:[%s2 + $0xc8] sm:$0xff]
  %v58 = vld [vmem:[%s2 + $0xd0] sm:$0xff]
  %v59 = vld [vmem:[%s2 + $0xd8] sm:$0xff]
  %v60 = vld [vmem:[%s2 + $0xe0] sm:$0xff]
  %v61 = vld [vmem:[%s2 + $0xe8] sm:$0xff]
  %v62 = vld [vmem:[%s2 + $0xf0] sm:$0xff]
  %v63 = vld [vmem:[%s2 + $0xf8] sm:$0xff]
  %v64 = vld [vmem:[%s3] sm:$0xff]
  %v65 = vld [vmem:[%s3 + $0x8] sm:$0xff]
  %v66 = vld [vmem:[%s3 + $0x10] sm:$0xff]
  %v67 = vld [vmem:[%s3 + $0x18] sm:$0xff]
  %v68 = vld [vmem:[%s3 + $0x20] sm:$0xff]
  %v69 = vld [vmem:[%s3 + $0x28] sm:$0xff]
  %v70 = vld [vmem:[%s3 + $0x30] sm:$0xff]
  %v71 = vld [vmem:[%s3 + $0x38] sm:$0xff]
  %v72 = vld [vmem:[%s3 + $0x40] sm:$0xff]
  %v73 = vld [vmem:[%s3 + $0x48] sm:$0xff]
  %v74 = vld [vmem:[%s3 + $0x50] sm:$0xff]
  %v75 = vld [vmem:[%s3 + $0x58] sm:$0xff]
  %v76 = vld [vmem:[%s3 + $0x60] sm:$0xff]
  %v77 = vld [vmem:[%s3 + $0x68] sm:$0xff]
  %v78 = vld [vmem:[%s3 + $0x70] sm:$0xff]
  %v79 = vld [vmem:[%s3 + $0x78] sm:$0xff]
  %v80 = vld [vmem:[%s3 + $0x80] sm:$0xff]
  %v81 = vld [vmem:[%s3 + $0x88] sm:$0xff]
  %v82 = vld [vmem:[%s3 + $0x90] sm:$0xff]
  %v83 = vld [vmem:[%s3 + $0x98] sm:$0xff]
  %v84 = vld [vmem:[%s3 + $0xa0] sm:$0xff]
  %v85 = vld [vmem:[%s3 + $0xa8] sm:$0xff]
  %v86 = vld [vmem:[%s3 + $0xb0] sm:$0xff]
  %v87 = vld [vmem:[%s3 + $0xb8] sm:$0xff]
  %v88 = vld [vmem:[%s3 + $0xc0] sm:$0xff]
  %v89 = vld [vmem:[%s3 + $0xc8] sm:$0xff]
  %v90 = vld [vmem:[%s3 + $0xd0] sm:$0xff]
  %v91 = vld [vmem:[%s3 + $0xd8] sm:$0xff]
  %v92 = vld [vmem:[%s3 + $0xe0] sm:$0xff]
  %v93 = vld [vmem:[%s3 + $0xe8] sm:$0xff]
  %v94 = vld [vmem:[%s3 + $0xf0] sm:$0xff]
  %v95 = vld [vmem:[%s3 + $0xf8] sm:$0xff]
  %vm96 = vcmask 64512
  %v98 = vsel %vm96, %v64, 0
  %v101 = vsel %vm96, %v65, 0
  %v104 = vsel %vm96, %v66, 0
  %v107 = vsel %vm96, %v67, 0
  %v110 = vsel %vm96, %v68, 0
  %v113 = vsel %vm96, %v69, 0
  %v116 = vsel %vm96, %v70, 0
  %v119 = vsel %vm96, %v71, 0
  %v122 = vsel %vm96, %v72, 0
  %v125 = vsel %vm96, %v73, 0
  %v128 = vsel %vm96, %v74, 0
  %v131 = vsel %vm96, %v75, 0
  %v134 = vsel %vm96, %v76, 0
  %v137 = vsel %vm96, %v77, 0
  %v140 = vsel %vm96, %v78, 0
  %v143 = vsel %vm96, %v79, 0
  %v146 = vsel %vm96, %v80, 0
  %v149 = vsel %vm96, %v81, 0
  %v152 = vsel %vm96, %v82, 0
  %v155 = vsel %vm96, %v83, 0
  %v158 = vsel %vm96, %v84, 0
  %v161 = vsel %vm96, %v85, 0
  %v164 = vsel %vm96, %v86, 0
  %v167 = vsel %vm96, %v87, 0
  %v170 = vsel %vm96, %v88, 0
  %v173 = vsel %vm96, %v89, 0
  %v176 = vsel %vm96, %v90, 0
  %v179 = vsel %vm96, %v91, 0
  %v182 = vsel %vm96, %v92, 0
  %v185 = vsel %vm96, %v93, 0
  %v188 = vsel %vm96, %v94, 0
  %v191 = vsel %vm96, %v95, 0
  %193 = vmatprep.subr.mxu0 0.0
  %194 = vmatpush1.msra.mxu0 %v31
  %195 = vmatprep.subr.mxu0 0.0
  %196 = vmatpush1.msra.mxu0 0.0
  %197 = vmatprep.subr.mxu0 0.0
  %198 = vmatpush1.msra.mxu0 0.0
  %199 = vmatprep.subr.mxu0 0.0
  %200 = vmatpush1.msra.mxu0 0.0
  %201 = vmatprep.subr.mxu0 0.0
  %202 = vmatpush1.msra.mxu0 0.0
  %203 = vmatprep.subr.mxu0 0.0
  %204 = vmatpush1.msra.mxu0 0.0
  %205 = vmatprep.subr.mxu0 0.0
  %206 = vmatpush1.msra.mxu0 0.0
  %207 = vmatprep.subr.mxu0 0.0
  %208 = vmatpush1.msra.mxu0 0.0
  %209 = vmatprep.subr.mxu0 0.0
  %210 = vmatpush1.msra.mxu0 0.0
  %211 = vmatprep.subr.mxu0 0.0
  %212 = vmatpush1.msra.mxu0 0.0
  %213 = vmatprep.subr.mxu0 0.0
  %214 = vmatpush1.msra.mxu0 0.0
  %215 = vmatprep.subr.mxu0 0.0
  %216 = vmatpush1.msra.mxu0 0.0
  %217 = vmatprep.subr.mxu0 0.0
  %218 = vmatpush1.msra.mxu0 0.0
  %219 = vmatprep.subr.mxu0 0.0
  %220 = vmatpush1.msra.mxu0 0.0
  %221 = vmatprep.subr.mxu0 0.0
  %222 = vmatpush1.msra.mxu0 0.0
  %223 = vmatprep.subr.mxu0 0.0
  %224 = vmatpush1.msra.mxu0 0.0
  %225 = vmatprep.subr.mxu0 0.0
  %226 = vmatpush1.msra.mxu0 0.0
  %227 = vmatprep.subr.mxu0 0.0
  %228 = vmatpush1.msra.mxu0 0.0
  %229 = vmatprep.subr.mxu0 0.0
  %230 = vmatpush1.msra.mxu0 0.0
  %231 = vmatprep.subr.mxu0 0.0
  %232 = vmatpush1.msra.mxu0 0.0
  %233 = vmatprep.subr.mxu0 0.0
  %234 = vmatpush1.msra.mxu0 0.0
  %235 = vmatprep.subr.mxu0 0.0
  %236 = vmatpush1.msra.mxu0 0.0
  %237 = vmatprep.subr.mxu0 0.0
  %238 = vmatpush1.msra.mxu0 0.0
  %239 = vmatprep.subr.mxu0 0.0
  %240 = vmatpush1.msra.mxu0 0.0
  %241 = vmatprep.subr.mxu0 0.0
  %242 = vmatpush1.msra.mxu0 0.0
  %243 = vmatprep.subr.mxu0 0.0
  %244 = vmatpush1.msra.mxu0 0.0
  %245 = vmatprep.subr.mxu0 0.0
  %246 = vmatpush1.msra.mxu0 0.0
  %247 = vmatprep.subr.mxu0 0.0
  %248 = vmatpush1.msra.mxu0 0.0
  %249 = vmatprep.subr.mxu0 0.0
  %250 = vmatpush1.msra.mxu0 0.0
  %251 = vmatprep.subr.mxu0 0.0
  %252 = vmatpush1.msra.mxu0 0.0
  %253 = vmatprep.subr.mxu0 0.0
  %254 = vmatpush1.msra.mxu0 0.0
  %255 = vmatprep.subr.mxu0 0.0
  %256 = vmatpush1.msra.mxu0 0.0
  %257 = vmatprep.mubr.f32.mxu0 0.0
  %258 = vmatmul.mubr.f32.gmra.mrb[0].mxu0 %v98
  %v259 = vpop.f32.mrb[0].mxu0
  %v260 = vadd.f32 0.0, %v259
  %v261 = vpop.f32.mrb[0].mxu0
  %262 = vmatprep.mubr.f32.mxu0 0.0
  %263 = vmatmul.mubr.f32.gmra.mrb[0].mxu0 %v101
  %v264 = vpop.f32.mrb[0].mxu0
  %v265 = vadd.f32 0.0, %v264
  %v266 = vpop.f32.mrb[0].mxu0
  %267 = vmatprep.mubr.f32.mxu0 0.0
  %268 = vmatmul.mubr.f32.gmra.mrb[0].mxu0 %v104
  %v269 = vpop.f32.mrb[0].mxu0
  %v270 = vadd.f32 0.0, %v269
  %v271 = vpop.f32.mrb[0].mxu0
  %272 = vmatprep.mubr.f32.mxu0 0.0
  %273 = vmatmul.mubr.f32.gmra.mrb[0].mxu0 %v107
  %v274 = vpop.f32.mrb[0].mxu0
  %v275 = vadd.f32 0.0, %v274
  %v276 = vpop.f32.mrb[0].mxu0
  %277 = vmatprep.mubr.f32.mxu0 0.0
  %278 = vmatmul.mubr.f32.gmra.mrb[0].mxu0 %v110
  %v279 = vpop.f32.mrb[0].mxu0
  %v280 = vadd.f32 0.0, %v279
  %v281 = vpop.f32.mrb[0].mxu0
  %282 = vmatprep.mubr.f32.mxu0 0.0
  %283 = vmatmul.mubr.f32.gmra.mrb[0].mxu0 %v113
  %v284 = vpop.f32.mrb[0].mxu0
  %v285 = vadd.f32 0.0, %v284
  %v286 = vpop.f32.mrb[0].mxu0
  %287 = vmatprep.mubr.f32.mxu0 0.0
  %288 = vmatmul.mubr.f32.gmra.mrb[0].mxu0 %v116
  %v289 = vpop.f32.mrb[0].mxu0
  %v290 = vadd.f32 0.0, %v289
  %v291 = vpop.f32.mrb[0].mxu0
  %292 = vmatprep.mubr.f32.mxu0 0.0
  %293 = vmatmul.mubr.f32.gmra.mrb[0].mxu0 %v119
  %v294 = vpop.f32.mrb[0].mxu0
  %v295 = vadd.f32 0.0, %v294
  %v296 = vpop.f32.mrb[0].mxu0
  %297 = vmatprep.mubr.f32.mxu0 0.0
  %298 = vmatmul.mubr.f32.gmra.mrb[0].mxu0 %v122
  %v299 = vpop.f32.mrb[0].mxu0
  %v300 = vadd.f32 0.0, %v299
  %v301 = vpop.f32.mrb[0].mxu0
  %302 = vmatprep.mubr.f32.mxu0 0.0
  %303 = vmatmul.mubr.f32.gmra.mrb[0].mxu0 %v125
  %v304 = vpop.f32.mrb[0].mxu0
  %v305 = vadd.f32 0.0, %v304
  %v306 = vpop.f32.mrb[0].mxu0
  %307 = vmatprep.mubr.f32.mxu0 0.0
  %308 = vmatmul.mubr.f32.gmra.mrb[0].mxu0 %v128
  %v309 = vpop.f32.mrb[0].mxu0
  %v310 = vadd.f32 0.0, %v309
  %v311 = vpop.f32.mrb[0].mxu0
  %312 = vmatprep.mubr.f32.mxu0 0.0
  %313 = vmatmul.mubr.f32.gmra.mrb[0].mxu0 %v131
  %v314 = vpop.f32.mrb[0].mxu0
  %v315 = vadd.f32 0.0, %v314
  %v316 = vpop.f32.mrb[0].mxu0
  %317 = vmatprep.mubr.f32.mxu0 0.0
  %318 = vmatmul.mubr.f32.gmra.mrb[0].mxu0 %v134
  %v319 = vpop.f32.mrb[0].mxu0
  %v320 = vadd.f32 0.0, %v319
  %v321 = vpop.f32.mrb[0].mxu0
  %322 = vmatprep.mubr.f32.mxu0 0.0
  %323 = vmatmul.mubr.f32.gmra.mrb[0].mxu0 %v137
  %v324 = vpop.f32.mrb[0].mxu0
  %v325 = vadd.f32 0.0, %v324
  %v326 = vpop.f32.mrb[0].mxu0
  %327 = vmatprep.mubr.f32.mxu0 0.0
  %328 = vmatmul.mubr.f32.gmra.mrb[0].mxu0 %v140
  %v329 = vpop.f32.mrb[0].mxu0
  %v330 = vadd.f32 0.0, %v329
  %v331 = vpop.f32.mrb[0].mxu0
  %332 = vmatprep.mubr.f32.mxu0 0.0
  %333 = vmatmul.mubr.f32.gmra.mrb[0].mxu0 %v143
  %v334 = vpop.f32.mrb[0].mxu0
  %v335 = vadd.f32 0.0, %v334
  %v336 = vpop.f32.mrb[0].mxu0
  %337 = vmatprep.mubr.f32.mxu0 0.0
  %338 = vmatmul.mubr.f32.gmra.mrb[0].mxu0 %v146
  %v339 = vpop.f32.mrb[0].mxu0
  %v340 = vadd.f32 0.0, %v339
  %v341 = vpop.f32.mrb[0].mxu0
  %342 = vmatprep.mubr.f32.mxu0 0.0
  %343 = vmatmul.mubr.f32.gmra.mrb[0].mxu0 %v149
  %v344 = vpop.f32.mrb[0].mxu0
  %v345 = vadd.f32 0.0, %v344
  %v346 = vpop.f32.mrb[0].mxu0
  %347 = vmatprep.mubr.f32.mxu0 0.0
  %348 = vmatmul.mubr.f32.gmra.mrb[0].mxu0 %v152
  %v349 = vpop.f32.mrb[0].mxu0
  %v350 = vadd.f32 0.0, %v349
  %v351 = vpop.f32.mrb[0].mxu0
  %352 = vmatprep.mubr.f32.mxu0 0.0
  %353 = vmatmul.mubr.f32.gmra.mrb[0].mxu0 %v155
  %v354 = vpop.f32.mrb[0].mxu0
  %v355 = vadd.f32 0.0, %v354
  %v356 = vpop.f32.mrb[0].mxu0
  %357 = vmatprep.mubr.f32.mxu0 0.0
  %358 = vmatmul.mubr.f32.gmra.mrb[0].mxu0 %v158
  %v359 = vpop.f32.mrb[0].mxu0
  %v360 = vadd.f32 0.0, %v359
  %v361 = vpop.f32.mrb[0].mxu0
  %362 = vmatprep.mubr.f32.mxu0 0.0
  %363 = vmatmul.mubr.f32.gmra.mrb[0].mxu0 %v161
  %v364 = vpop.f32.mrb[0].mxu0
  %v365 = vadd.f32 0.0, %v364
  %v366 = vpop.f32.mrb[0].mxu0
  %367 = vmatprep.mubr.f32.mxu0 0.0
  %368 = vmatmul.mubr.f32.gmra.mrb[0].mxu0 %v164
  %v369 = vpop.f32.mrb[0].mxu0
  %v370 = vadd.f32 0.0, %v369
  %v371 = vpop.f32.mrb[0].mxu0
  %372 = vmatprep.mubr.f32.mxu0 0.0
  %373 = vmatmul.mubr.f32.gmra.mrb[0].mxu0 %v167
  %v374 = vpop.f32.mrb[0].mxu0
  %v375 = vadd.f32 0.0, %v374
  %v376 = vpop.f32.mrb[0].mxu0
  %377 = vmatprep.mubr.f32.mxu0 0.0
  %378 = vmatmul.mubr.f32.gmra.mrb[0].mxu0 %v170
  %v379 = vpop.f32.mrb[0].mxu0
  %v380 = vadd.f32 0.0, %v379
  %v381 = vpop.f32.mrb[0].mxu0
  %382 = vmatprep.mubr.f32.mxu0 0.0
  %383 = vmatmul.mubr.f32.gmra.mrb[0].mxu0 %v173
  %v384 = vpop.f32.mrb[0].mxu0
  %v385 = vadd.f32 0.0, %v384
  %v386 = vpop.f32.mrb[0].mxu0
  %387 = vmatprep.mubr.f32.mxu0 0.0
  %388 = vmatmul.mubr.f32.gmra.mrb[0].mxu0 %v176
  %v389 = vpop.f32.mrb[0].mxu0
  %v390 = vadd.f32 0.0, %v389
  %v391 = vpop.f32.mrb[0].mxu0
  %392 = vmatprep.mubr.f32.mxu0 0.0
  %393 = vmatmul.mubr.f32.gmra.mrb[0].mxu0 %v179
  %v394 = vpop.f32.mrb[0].mxu0
  %v395 = vadd.f32 0.0, %v394
  %v396 = vpop.f32.mrb[0].mxu0
  %397 = vmatprep.mubr.f32.mxu0 0.0
  %398 = vmatmul.mubr.f32.gmra.mrb[0].mxu0 %v182
  %v399 = vpop.f32.mrb[0].mxu0
  %v400 = vadd.f32 0.0, %v399
  %v401 = vpop.f32.mrb[0].mxu0
  %402 = vmatprep.mubr.f32.mxu0 0.0
  %403 = vmatmul.mubr.f32.gmra.mrb[0].mxu0 %v185
  %v404 = vpop.f32.mrb[0].mxu0
  %v405 = vadd.f32 0.0, %v404
  %v406 = vpop.f32.mrb[0].mxu0
  %407 = vmatprep.mubr.f32.mxu0 0.0
  %408 = vmatmul.mubr.f32.gmra.mrb[0].mxu0 %v188
  %v409 = vpop.f32.mrb[0].mxu0
  %v410 = vadd.f32 0.0, %v409
  %v411 = vpop.f32.mrb[0].mxu0
  %412 = vmatprep.mubr.f32.mxu0 0.0
  %413 = vmatmul.mubr.f32.gmra.mrb[0].mxu0 %v191
  %v414 = vpop.f32.mrb[0].mxu0
  %v415 = vadd.f32 0.0, %v414
  %v416 = vpop.f32.mrb[0].mxu0
  %417 = vdwg.mxu0
  %vm418 = vcmask 130048
  %v420 = vsel %vm418, %v32, 0
  %v423 = vsel %vm418, %v33, 0
  %v426 = vsel %vm418, %v34, 0
  %v429 = vsel %vm418, %v35, 0
  %v432 = vsel %vm418, %v36, 0
  %v435 = vsel %vm418, %v37, 0
  %v438 = vsel %vm418, %v38, 0
  %v441 = vsel %vm418, %v39, 0
  %v444 = vsel %vm418, %v40, 0
  %v447 = vsel %vm418, %v41, 0
  %v450 = vsel %vm418, %v42, 0
  %v453 = vsel %vm418, %v43, 0
  %v456 = vsel %vm418, %v44, 0
  %v459 = vsel %vm418, %v45, 0
  %v462 = vsel %vm418, %v46, 0
  %v465 = vsel %vm418, %v47, 0
  %v468 = vsel %vm418, %v48, 0
  %v471 = vsel %vm418, %v49, 0
  %v474 = vsel %vm418, %v50, 0
  %v477 = vsel %vm418, %v51, 0
  %v480 = vsel %vm418, %v52, 0
  %v483 = vsel %vm418, %v53, 0
  %v486 = vsel %vm418, %v54, 0
  %v489 = vsel %vm418, %v55, 0
  %v492 = vsel %vm418, %v56, 0
  %v495 = vsel %vm418, %v57, 0
  %v498 = vsel %vm418, %v58, 0
  %v501 = vsel %vm418, %v59, 0
  %v504 = vsel %vm418, %v60, 0
  %v507 = vsel %vm418, %v61, 0
  %v510 = vsel %vm418, %v62, 0
  %v513 = vsel %vm418, %v63, 0
  %515 = vmatprep.subr.mxu0 0.0
  %516 = vmatpush1.msra.mxu0 %v29
  %517 = vmatprep.subr.mxu0 0.0
  %518 = vmatpush1.msra.mxu0 %v30
  %519 = vmatprep.subr.mxu0 0.0
  %520 = vmatpush1.msra.mxu0 0.0
  %521 = vmatprep.subr.mxu0 0.0
  %522 = vmatpush1.msra.mxu0 0.0
  %523 = vmatprep.subr.mxu0 0.0
  %524 = vmatpush1.msra.mxu0 0.0
  %525 = vmatprep.subr.mxu0 0.0
  %526 = vmatpush1.msra.mxu0 0.0
  %527 = vmatprep.subr.mxu0 0.0
  %528 = vmatpush1.msra.mxu0 0.0
  %529 = vmatprep.subr.mxu0 0.0
  %530 = vmatpush1.msra.mxu0 0.0
  %531 = vmatprep.subr.mxu0 0.0
  %532 = vmatpush1.msra.mxu0 0.0
  %533 = vmatprep.subr.mxu0 0.0
  %534 = vmatpush1.msra.mxu0 0.0
  %535 = vmatprep.subr.mxu0 0.0
  %536 = vmatpush1.msra.mxu0 0.0
  %537 = vmatprep.subr.mxu0 0.0
  %538 = vmatpush1.msra.mxu0 0.0
  %539 = vmatprep.subr.mxu0 0.0
  %540 = vmatpush1.msra.mxu0 0.0
  %541 = vmatprep.subr.mxu0 0.0
  %542 = vmatpush1.msra.mxu0 0.0
  %543 = vmatprep.subr.mxu0 0.0
  %544 = vmatpush1.msra.mxu0 0.0
  %545 = vmatprep.subr.mxu0 0.0
  %546 = vmatpush1.msra.mxu0 0.0
  %547 = vmatprep.subr.mxu0 0.0
  %548 = vmatpush1.msra.mxu0 0.0
  %549 = vmatprep.subr.mxu0 0.0
  %550 = vmatpush1.msra.mxu0 0.0
  %551 = vmatprep.subr.mxu0 0.0
  %552 = vmatpush1.msra.mxu0 0.0
  %553 = vmatprep.subr.mxu0 0.0
  %554 = vmatpush1.msra.mxu0 0.0
  %555 = vmatprep.subr.mxu0 0.0
  %556 = vmatpush1.msra.mxu0 0.0
  %557 = vmatprep.subr.mxu0 0.0
  %558 = vmatpush1.msra.mxu0 0.0
  %559 = vmatprep.subr.mxu0 0.0
  %560 = vmatpush1.msra.mxu0 0.0
  %561 = vmatprep.subr.mxu0 0.0
  %562 = vmatpush1.msra.mxu0 0.0
  %563 = vmatprep.subr.mxu0 0.0
  %564 = vmatpush1.msra.mxu0 0.0
  %565 = vmatprep.subr.mxu0 0.0
  %566 = vmatpush1.msra.mxu0 0.0
  %567 = vmatprep.subr.mxu0 0.0
  %568 = vmatpush1.msra.mxu0 0.0
  %569 = vmatprep.subr.mxu0 0.0
  %570 = vmatpush1.msra.mxu0 0.0
  %571 = vmatprep.subr.mxu0 0.0
  %572 = vmatpush1.msra.mxu0 0.0
  %573 = vmatprep.subr.mxu0 0.0
  %574 = vmatpush1.msra.mxu0 0.0
  %575 = vmatprep.subr.mxu0 0.0
  %576 = vmatpush1.msra.mxu0 0.0
  %577 = vmatprep.subr.mxu0 0.0
  %578 = vmatpush1.msra.mxu0 0.0
  %579 = vmatprep.mubr.f32.mxu0 0.0
  %580 = vmatmul.mubr.f32.gmra.mrb[0].mxu0 %v420
  %v581 = vpop.f32.mrb[0].mxu0
  %v582 = vadd.f32 %v260, %v581
  %v583 = vpop.f32.mrb[0].mxu0
  %584 = vmatprep.mubr.f32.mxu0 0.0
  %585 = vmatmul.mubr.f32.gmra.mrb[0].mxu0 %v423
  %v586 = vpop.f32.mrb[0].mxu0
  %v587 = vadd.f32 %v265, %v586
  %v588 = vpop.f32.mrb[0].mxu0
  %589 = vmatprep.mubr.f32.mxu0 0.0
  %590 = vmatmul.mubr.f32.gmra.mrb[0].mxu0 %v426
  %v591 = vpop.f32.mrb[0].mxu0
  %v592 = vadd.f32 %v270, %v591
  %v593 = vpop.f32.mrb[0].mxu0
  %594 = vmatprep.mubr.f32.mxu0 0.0
  %595 = vmatmul.mubr.f32.gmra.mrb[0].mxu0 %v429
  %v596 = vpop.f32.mrb[0].mxu0
  %v597 = vadd.f32 %v275, %v596
  %v598 = vpop.f32.mrb[0].mxu0
  %599 = vmatprep.mubr.f32.mxu0 0.0
  %600 = vmatmul.mubr.f32.gmra.mrb[0].mxu0 %v432
  %v601 = vpop.f32.mrb[0].mxu0
  %v602 = vadd.f32 %v280, %v601
  %v603 = vpop.f32.mrb[0].mxu0
  %604 = vmatprep.mubr.f32.mxu0 0.0
  %605 = vmatmul.mubr.f32.gmra.mrb[0].mxu0 %v435
  %v606 = vpop.f32.mrb[0].mxu0
  %v607 = vadd.f32 %v285, %v606
  %v608 = vpop.f32.mrb[0].mxu0
  %609 = vmatprep.mubr.f32.mxu0 0.0
  %610 = vmatmul.mubr.f32.gmra.mrb[0].mxu0 %v438
  %v611 = vpop.f32.mrb[0].mxu0
  %v612 = vadd.f32 %v290, %v611
  %v613 = vpop.f32.mrb[0].mxu0
  %614 = vmatprep.mubr.f32.mxu0 0.0
  %615 = vmatmul.mubr.f32.gmra.mrb[0].mxu0 %v441
  %v616 = vpop.f32.mrb[0].mxu0
  %v617 = vadd.f32 %v295, %v616
  %v618 = vpop.f32.mrb[0].mxu0
  %619 = vmatprep.mubr.f32.mxu0 0.0
  %620 = vmatmul.mubr.f32.gmra.mrb[0].mxu0 %v444
  %v621 = vpop.f32.mrb[0].mxu0
  %v622 = vadd.f32 %v300, %v621
  %v623 = vpop.f32.mrb[0].mxu0
  %624 = vmatprep.mubr.f32.mxu0 0.0
  %625 = vmatmul.mubr.f32.gmra.mrb[0].mxu0 %v447
  %v626 = vpop.f32.mrb[0].mxu0
  %v627 = vadd.f32 %v305, %v626
  %v628 = vpop.f32.mrb[0].mxu0
  %629 = vmatprep.mubr.f32.mxu0 0.0
  %630 = vmatmul.mubr.f32.gmra.mrb[0].mxu0 %v450
  %v631 = vpop.f32.mrb[0].mxu0
  %v632 = vadd.f32 %v310, %v631
  %v633 = vpop.f32.mrb[0].mxu0
  %634 = vmatprep.mubr.f32.mxu0 0.0
  %635 = vmatmul.mubr.f32.gmra.mrb[0].mxu0 %v453
  %v636 = vpop.f32.mrb[0].mxu0
  %v637 = vadd.f32 %v315, %v636
  %v638 = vpop.f32.mrb[0].mxu0
  %639 = vmatprep.mubr.f32.mxu0 0.0
  %640 = vmatmul.mubr.f32.gmra.mrb[0].mxu0 %v456
  %v641 = vpop.f32.mrb[0].mxu0
  %v642 = vadd.f32 %v320, %v641
  %v643 = vpop.f32.mrb[0].mxu0
  %644 = vmatprep.mubr.f32.mxu0 0.0
  %645 = vmatmul.mubr.f32.gmra.mrb[0].mxu0 %v459
  %v646 = vpop.f32.mrb[0].mxu0
  %v647 = vadd.f32 %v325, %v646
  %v648 = vpop.f32.mrb[0].mxu0
  %649 = vmatprep.mubr.f32.mxu0 0.0
  %650 = vmatmul.mubr.f32.gmra.mrb[0].mxu0 %v462
  %v651 = vpop.f32.mrb[0].mxu0
  %v652 = vadd.f32 %v330, %v651
  %v653 = vpop.f32.mrb[0].mxu0
  %654 = vmatprep.mubr.f32.mxu0 0.0
  %655 = vmatmul.mubr.f32.gmra.mrb[0].mxu0 %v465
  %v656 = vpop.f32.mrb[0].mxu0
  %v657 = vadd.f32 %v335, %v656
  %v658 = vpop.f32.mrb[0].mxu0
  %659 = vmatprep.mubr.f32.mxu0 0.0
  %660 = vmatmul.mubr.f32.gmra.mrb[0].mxu0 %v468
  %v661 = vpop.f32.mrb[0].mxu0
  %v662 = vadd.f32 %v340, %v661
  %v663 = vpop.f32.mrb[0].mxu0
  %664 = vmatprep.mubr.f32.mxu0 0.0
  %665 = vmatmul.mubr.f32.gmra.mrb[0].mxu0 %v471
  %v666 = vpop.f32.mrb[0].mxu0
  %v667 = vadd.f32 %v345, %v666
  %v668 = vpop.f32.mrb[0].mxu0
  %669 = vmatprep.mubr.f32.mxu0 0.0
  %670 = vmatmul.mubr.f32.gmra.mrb[0].mxu0 %v474
  %v671 = vpop.f32.mrb[0].mxu0
  %v672 = vadd.f32 %v350, %v671
  %v673 = vpop.f32.mrb[0].mxu0
  %674 = vmatprep.mubr.f32.mxu0 0.0
  %675 = vmatmul.mubr.f32.gmra.mrb[0].mxu0 %v477
  %v676 = vpop.f32.mrb[0].mxu0
  %v677 = vadd.f32 %v355, %v676
  %v678 = vpop.f32.mrb[0].mxu0
  %679 = vmatprep.mubr.f32.mxu0 0.0
  %680 = vmatmul.mubr.f32.gmra.mrb[0].mxu0 %v480
  %v681 = vpop.f32.mrb[0].mxu0
  %v682 = vadd.f32 %v360, %v681
  %v683 = vpop.f32.mrb[0].mxu0
  %684 = vmatprep.mubr.f32.mxu0 0.0
  %685 = vmatmul.mubr.f32.gmra.mrb[0].mxu0 %v483
  %v686 = vpop.f32.mrb[0].mxu0
  %v687 = vadd.f32 %v365, %v686
  %v688 = vpop.f32.mrb[0].mxu0
  %689 = vmatprep.mubr.f32.mxu0 0.0
  %690 = vmatmul.mubr.f32.gmra.mrb[0].mxu0 %v486
  %v691 = vpop.f32.mrb[0].mxu0
  %v692 = vadd.f32 %v370, %v691
  %v693 = vpop.f32.mrb[0].mxu0
  %694 = vmatprep.mubr.f32.mxu0 0.0
  %695 = vmatmul.mubr.f32.gmra.mrb[0].mxu0 %v489
  %v696 = vpop.f32.mrb[0].mxu0
  %v697 = vadd.f32 %v375, %v696
  %v698 = vpop.f32.mrb[0].mxu0
  %699 = vmatprep.mubr.f32.mxu0 0.0
  %700 = vmatmul.mubr.f32.gmra.mrb[0].mxu0 %v492
  %v701 = vpop.f32.mrb[0].mxu0
  %v702 = vadd.f32 %v380, %v701
  %v703 = vpop.f32.mrb[0].mxu0
  %704 = vmatprep.mubr.f32.mxu0 0.0
  %705 = vmatmul.mubr.f32.gmra.mrb[0].mxu0 %v495
  %v706 = vpop.f32.mrb[0].mxu0
  %v707 = vadd.f32 %v385, %v706
  %v708 = vpop.f32.mrb[0].mxu0
  %709 = vmatprep.mubr.f32.mxu0 0.0
  %710 = vmatmul.mubr.f32.gmra.mrb[0].mxu0 %v498
  %v711 = vpop.f32.mrb[0].mxu0
  %v712 = vadd.f32 %v390, %v711
  %v713 = vpop.f32.mrb[0].mxu0
  %714 = vmatprep.mubr.f32.mxu0 0.0
  %715 = vmatmul.mubr.f32.gmra.mrb[0].mxu0 %v501
  %v716 = vpop.f32.mrb[0].mxu0
  %v717 = vadd.f32 %v395, %v716
  %v718 = vpop.f32.mrb[0].mxu0
  %719 = vmatprep.mubr.f32.mxu0 0.0
  %720 = vmatmul.mubr.f32.gmra.mrb[0].mxu0 %v504
  %v721 = vpop.f32.mrb[0].mxu0
  %v722 = vadd.f32 %v400, %v721
  %v723 = vpop.f32.mrb[0].mxu0
  %724 = vmatprep.mubr.f32.mxu0 0.0
  %725 = vmatmul.mubr.f32.gmra.mrb[0].mxu0 %v507
  %v726 = vpop.f32.mrb[0].mxu0
  %v727 = vadd.f32 %v405, %v726
  %v728 = vpop.f32.mrb[0].mxu0
  %729 = vmatprep.mubr.f32.mxu0 0.0
  %730 = vmatmul.mubr.f32.gmra.mrb[0].mxu0 %v510
  %v731 = vpop.f32.mrb[0].mxu0
  %v732 = vadd.f32 %v410, %v731
  %v733 = vpop.f32.mrb[0].mxu0
  %734 = vmatprep.mubr.f32.mxu0 0.0
  %735 = vmatmul.mubr.f32.gmra.mrb[0].mxu0 %v513
  %v736 = vpop.f32.mrb[0].mxu0
  %v737 = vadd.f32 %v415, %v736
  %v738 = vpop.f32.mrb[0].mxu0
  %739 = vdwg.mxu0
  %v740 = vld [vmem:[%s4] sm:$0xff]
  %v741 = vld [vmem:[%s4 + $0x8] sm:$0xff]
  %v742 = vld [vmem:[%s4 + $0x10] sm:$0xff]
  %v743 = vld [vmem:[%s4 + $0x18] sm:$0xff]
  %v744 = vld [vmem:[%s4 + $0x20] sm:$0xff]
  %v745 = vld [vmem:[%s4 + $0x28] sm:$0xff]
  %v746 = vld [vmem:[%s4 + $0x30] sm:$0xff]
  %v747 = vld [vmem:[%s4 + $0x38] sm:$0xff]
  %v748 = vld [vmem:[%s4 + $0x40] sm:$0xff]
  %v749 = vld [vmem:[%s4 + $0x48] sm:$0xff]
  %v750 = vld [vmem:[%s4 + $0x50] sm:$0xff]
  %v751 = vld [vmem:[%s4 + $0x58] sm:$0xff]
  %v752 = vld [vmem:[%s4 + $0x60] sm:$0xff]
  %v753 = vld [vmem:[%s4 + $0x68] sm:$0xff]
  %v754 = vld [vmem:[%s4 + $0x70] sm:$0xff]
  %v755 = vld [vmem:[%s4 + $0x78] sm:$0xff]
  %v756 = vld [vmem:[%s4 + $0x80] sm:$0xff]
  %v757 = vld [vmem:[%s4 + $0x88] sm:$0xff]
  %v758 = vld [vmem:[%s4 + $0x90] sm:$0xff]
  %v759 = vld [vmem:[%s4 + $0x98] sm:$0xff]
  %v760 = vld [vmem:[%s4 + $0xa0] sm:$0xff]
  %v761 = vld [vmem:[%s4 + $0xa8] sm:$0xff]
  %v762 = vld [vmem:[%s4 + $0xb0] sm:$0xff]
  %v763 = vld [vmem:[%s4 + $0xb8] sm:$0xff]
  %v764 = vld [vmem:[%s4 + $0xc0] sm:$0xff]
  %v765 = vld [vmem:[%s4 + $0xc8] sm:$0xff]
  %v766 = vld [vmem:[%s4 + $0xd0] sm:$0xff]
  %v767 = vld [vmem:[%s4 + $0xd8] sm:$0xff]
  %v768 = vld [vmem:[%s4 + $0xe0] sm:$0xff]
  %v769 = vld [vmem:[%s4 + $0xe8] sm:$0xff]
  %v770 = vld [vmem:[%s4 + $0xf0] sm:$0xff]
  %v771 = vld [vmem:[%s4 + $0xf8] sm:$0xff]
  %773 = vset.pattern.permute.xlu0 0
  %774 = vperm.xlu0 %773, %v740
  %v775 = vpop.permute.xlu0 %774
  %778 = vset.pattern.permute.xlu0 0
  %779 = vperm.xlu0 %778, %v741
  %v780 = vpop.permute.xlu0 %779
  %783 = vset.pattern.permute.xlu0 0
  %784 = vperm.xlu0 %783, %v742
  %v785 = vpop.permute.xlu0 %784
  %788 = vset.pattern.permute.xlu0 0
  %789 = vperm.xlu0 %788, %v743
  %v790 = vpop.permute.xlu0 %789
  %793 = vset.pattern.permute.xlu0 0
  %794 = vperm.xlu0 %793, %v744
  %v795 = vpop.permute.xlu0 %794
  %798 = vset.pattern.permute.xlu0 0
  %799 = vperm.xlu0 %798, %v745
  %v800 = vpop.permute.xlu0 %799
  %803 = vset.pattern.permute.xlu0 0
  %804 = vperm.xlu0 %803, %v746
  %v805 = vpop.permute.xlu0 %804
  %808 = vset.pattern.permute.xlu0 0
  %809 = vperm.xlu0 %808, %v747
  %v810 = vpop.permute.xlu0 %809
  %813 = vset.pattern.permute.xlu0 0
  %814 = vperm.xlu0 %813, %v748
  %v815 = vpop.permute.xlu0 %814
  %818 = vset.pattern.permute.xlu0 0
  %819 = vperm.xlu0 %818, %v749
  %v820 = vpop.permute.xlu0 %819
  %823 = vset.pattern.permute.xlu0 0
  %824 = vperm.xlu0 %823, %v750
  %v825 = vpop.permute.xlu0 %824
  %828 = vset.pattern.permute.xlu0 0
  %829 = vperm.xlu0 %828, %v751
  %v830 = vpop.permute.xlu0 %829
  %833 = vset.pattern.permute.xlu0 0
  %834 = vperm.xlu0 %833, %v752
  %v835 = vpop.permute.xlu0 %834
  %838 = vset.pattern.permute.xlu0 0
  %839 = vperm.xlu0 %838, %v753
  %v840 = vpop.permute.xlu0 %839
  %843 = vset.pattern.permute.xlu0 0
  %844 = vperm.xlu0 %843, %v754
  %v845 = vpop.permute.xlu0 %844
  %848 = vset.pattern.permute.xlu0 0
  %849 = vperm.xlu0 %848, %v755
  %v850 = vpop.permute.xlu0 %849
  %853 = vset.pattern.permute.xlu0 0
  %854 = vperm.xlu0 %853, %v756
  %v855 = vpop.permute.xlu0 %854
  %858 = vset.pattern.permute.xlu0 0
  %859 = vperm.xlu0 %858, %v757
  %v860 = vpop.permute.xlu0 %859
  %863 = vset.pattern.permute.xlu0 0
  %864 = vperm.xlu0 %863, %v758
  %v865 = vpop.permute.xlu0 %864
  %868 = vset.pattern.permute.xlu0 0
  %869 = vperm.xlu0 %868, %v759
  %v870 = vpop.permute.xlu0 %869
  %873 = vset.pattern.permute.xlu0 0
  %874 = vperm.xlu0 %873, %v760
  %v875 = vpop.permute.xlu0 %874
  %878 = vset.pattern.permute.xlu0 0
  %879 = vperm.xlu0 %878, %v761
  %v880 = vpop.permute.xlu0 %879
  %883 = vset.pattern.permute.xlu0 0
  %884 = vperm.xlu0 %883, %v762
  %v885 = vpop.permute.xlu0 %884
  %888 = vset.pattern.permute.xlu0 0
  %889 = vperm.xlu0 %888, %v763
  %v890 = vpop.permute.xlu0 %889
  %893 = vset.pattern.permute.xlu0 0
  %894 = vperm.xlu0 %893, %v764
  %v895 = vpop.permute.xlu0 %894
  %898 = vset.pattern.permute.xlu0 0
  %899 = vperm.xlu0 %898, %v765
  %v900 = vpop.permute.xlu0 %899
  %903 = vset.pattern.permute.xlu0 0
  %904 = vperm.xlu0 %903, %v766
  %v905 = vpop.permute.xlu0 %904
  %908 = vset.pattern.permute.xlu0 0
  %909 = vperm.xlu0 %908, %v767
  %v910 = vpop.permute.xlu0 %909
  %913 = vset.pattern.permute.xlu0 0
  %914 = vperm.xlu0 %913, %v768
  %v915 = vpop.permute.xlu0 %914
  %918 = vset.pattern.permute.xlu0 0
  %919 = vperm.xlu0 %918, %v769
  %v920 = vpop.permute.xlu0 %919
  %923 = vset.pattern.permute.xlu0 0
  %924 = vperm.xlu0 %923, %v770
  %v925 = vpop.permute.xlu0 %924
  %928 = vset.pattern.permute.xlu0 0
  %929 = vperm.xlu0 %928, %v771
  %v930 = vpop.permute.xlu0 %929
  %v932 = vadd.f32 %v582, %v775
  %v933 = vadd.f32 %v587, %v780
  %v934 = vadd.f32 %v592, %v785
  %v935 = vadd.f32 %v597, %v790
  %v936 = vadd.f32 %v602, %v795
  %v937 = vadd.f32 %v607, %v800
  %v938 = vadd.f32 %v612, %v805
  %v939 = vadd.f32 %v617, %v810
  %v940 = vadd.f32 %v622, %v815
  %v941 = vadd.f32 %v627, %v820
  %v942 = vadd.f32 %v632, %v825
  %v943 = vadd.f32 %v637, %v830
  %v944 = vadd.f32 %v642, %v835
  %v945 = vadd.f32 %v647, %v840
  %v946 = vadd.f32 %v652, %v845
  %v947 = vadd.f32 %v657, %v850
  %v948 = vadd.f32 %v662, %v855
  %v949 = vadd.f32 %v667, %v860
  %v950 = vadd.f32 %v672, %v865
  %v951 = vadd.f32 %v677, %v870
  %v952 = vadd.f32 %v682, %v875
  %v953 = vadd.f32 %v687, %v880
  %v954 = vadd.f32 %v692, %v885
  %v955 = vadd.f32 %v697, %v890
  %v956 = vadd.f32 %v702, %v895
  %v957 = vadd.f32 %v707, %v900
  %v958 = vadd.f32 %v712, %v905
  %v959 = vadd.f32 %v717, %v910
  %v960 = vadd.f32 %v722, %v915
  %v961 = vadd.f32 %v727, %v920
  %v962 = vadd.f32 %v732, %v925
  %v963 = vadd.f32 %v737, %v930
  %vm964 = vcmp.gt.f32.partialorder %v932, 0.0
  %vm965 = vcmp.gt.f32.partialorder %v933, 0.0
  %vm966 = vcmp.gt.f32.partialorder %v934, 0.0
  %vm967 = vcmp.gt.f32.partialorder %v935, 0.0
  %vm968 = vcmp.gt.f32.partialorder %v936, 0.0
  %vm969 = vcmp.gt.f32.partialorder %v937, 0.0
  %vm970 = vcmp.gt.f32.partialorder %v938, 0.0
  %vm971 = vcmp.gt.f32.partialorder %v939, 0.0
  %vm972 = vcmp.gt.f32.partialorder %v940, 0.0
  %vm973 = vcmp.gt.f32.partialorder %v941, 0.0
  %vm974 = vcmp.gt.f32.partialorder %v942, 0.0
  %vm975 = vcmp.gt.f32.partialorder %v943, 0.0
  %vm976 = vcmp.gt.f32.partialorder %v944, 0.0
  %vm977 = vcmp.gt.f32.partialorder %v945, 0.0
  %vm978 = vcmp.gt.f32.partialorder %v946, 0.0
  %vm979 = vcmp.gt.f32.partialorder %v947, 0.0
  %vm980 = vcmp.gt.f32.partialorder %v948, 0.0
  %vm981 = vcmp.gt.f32.partialorder %v949, 0.0
  %vm982 = vcmp.gt.f32.partialorder %v950, 0.0
  %vm983 = vcmp.gt.f32.partialorder %v951, 0.0
  %vm984 = vcmp.gt.f32.partialorder %v952, 0.0
  %vm985 = vcmp.gt.f32.partialorder %v953, 0.0
  %vm986 = vcmp.gt.f32.partialorder %v954, 0.0
  %vm987 = vcmp.gt.f32.partialorder %v955, 0.0
  %vm988 = vcmp.gt.f32.partialorder %v956, 0.0
  %vm989 = vcmp.gt.f32.partialorder %v957, 0.0
  %vm990 = vcmp.gt.f32.partialorder %v958, 0.0
  %vm991 = vcmp.gt.f32.partialorder %v959, 0.0
  %vm992 = vcmp.gt.f32.partialorder %v960, 0.0
  %vm993 = vcmp.gt.f32.partialorder %v961, 0.0
  %vm994 = vcmp.gt.f32.partialorder %v962, 0.0
  %vm995 = vcmp.gt.f32.partialorder %v963, 0.0
  %v996 = vmul.f32 %v932, 0.2
  %v997 = vmul.f32 %v933, 0.2
  %v998 = vmul.f32 %v934, 0.2
  %v999 = vmul.f32 %v935, 0.2
  %v1000 = vmul.f32 %v936, 0.2
  %v1001 = vmul.f32 %v937, 0.2
  %v1002 = vmul.f32 %v938, 0.2
  %v1003 = vmul.f32 %v939, 0.2
  %v1004 = vmul.f32 %v940, 0.2
  %v1005 = vmul.f32 %v941, 0.2
  %v1006 = vmul.f32 %v942, 0.2
  %v1007 = vmul.f32 %v943, 0.2
  %v1008 = vmul.f32 %v944, 0.2
  %v1009 = vmul.f32 %v945, 0.2
  %v1010 = vmul.f32 %v946, 0.2
  %v1011 = vmul.f32 %v947, 0.2
  %v1012 = vmul.f32 %v948, 0.2
  %v1013 = vmul.f32 %v949, 0.2
  %v1014 = vmul.f32 %v950, 0.2
  %v1015 = vmul.f32 %v951, 0.2
  %v1016 = vmul.f32 %v952, 0.2
  %v1017 = vmul.f32 %v953, 0.2
  %v1018 = vmul.f32 %v954, 0.2
  %v1019 = vmul.f32 %v955, 0.2
  %v1020 = vmul.f32 %v956, 0.2
  %v1021 = vmul.f32 %v957, 0.2
  %v1022 = vmul.f32 %v958, 0.2
  %v1023 = vmul.f32 %v959, 0.2
  %v1024 = vmul.f32 %v960, 0.2
  %v1025 = vmul.f32 %v961, 0.2
  %v1026 = vmul.f32 %v962, 0.2
  %v1027 = vmul.f32 %v963, 0.2
  %v1028 = vsel %vm964, %v932, %v996
  %v1029 = vsel %vm965, %v933, %v997
  %v1030 = vsel %vm966, %v934, %v998
  %v1031 = vsel %vm967, %v935, %v999
  %v1032 = vsel %vm968, %v936, %v1000
  %v1033 = vsel %vm969, %v937, %v1001
  %v1034 = vsel %vm970, %v938, %v1002
  %v1035 = vsel %vm971, %v939, %v1003
  %v1036 = vsel %vm972, %v940, %v1004
  %v1037 = vsel %vm973, %v941, %v1005
  %v1038 = vsel %vm974, %v942, %v1006
  %v1039 = vsel %vm975, %v943, %v1007
  %v1040 = vsel %vm976, %v944, %v1008
  %v1041 = vsel %vm977, %v945, %v1009
  %v1042 = vsel %vm978, %v946, %v1010
  %v1043 = vsel %vm979, %v947, %v1011
  %v1044 = vsel %vm980, %v948, %v1012
  %v1045 = vsel %vm981, %v949, %v1013
  %v1046 = vsel %vm982, %v950, %v1014
  %v1047 = vsel %vm983, %v951, %v1015
  %v1048 = vsel %vm984, %v952, %v1016
  %v1049 = vsel %vm985, %v953, %v1017
  %v1050 = vsel %vm986, %v954, %v1018
  %v1051 = vsel %vm987, %v955, %v1019
  %v1052 = vsel %vm988, %v956, %v1020
  %v1053 = vsel %vm989, %v957, %v1021
  %v1054 = vsel %vm990, %v958, %v1022
  %v1055 = vsel %vm991, %v959, %v1023
  %v1056 = vsel %vm992, %v960, %v1024
  %v1057 = vsel %vm993, %v961, %v1025
  %v1058 = vsel %vm994, %v962, %v1026
  %v1059 = vsel %vm995, %v963, %v1027
  %v1060 = vld [vmem:[%s5] sm:$0xff]
  %v1061 = vld [vmem:[%s5 + $0x8] sm:$0xff]
  %v1062 = vld [vmem:[%s5 + $0x10] sm:$0xff]
  %v1063 = vld [vmem:[%s5 + $0x18] sm:$0xff]
  %v1064 = vld [vmem:[%s5 + $0x20] sm:$0xff]
  %v1065 = vld [vmem:[%s5 + $0x28] sm:$0xff]
  %v1066 = vld [vmem:[%s5 + $0x30] sm:$0xff]
  %v1067 = vld [vmem:[%s5 + $0x38] sm:$0xff]
  %v1068 = vld [vmem:[%s5 + $0x40] sm:$0xff]
  %v1069 = vld [vmem:[%s5 + $0x48] sm:$0xff]
  %v1070 = vld [vmem:[%s5 + $0x50] sm:$0xff]
  %v1071 = vld [vmem:[%s5 + $0x58] sm:$0xff]
  %v1072 = vld [vmem:[%s5 + $0x60] sm:$0xff]
  %v1073 = vld [vmem:[%s5 + $0x68] sm:$0xff]
  %v1074 = vld [vmem:[%s5 + $0x70] sm:$0xff]
  %v1075 = vld [vmem:[%s5 + $0x78] sm:$0xff]
  %v1076 = vld [vmem:[%s5 + $0x80] sm:$0xff]
  %v1077 = vld [vmem:[%s5 + $0x88] sm:$0xff]
  %v1078 = vld [vmem:[%s5 + $0x90] sm:$0xff]
  %v1079 = vld [vmem:[%s5 + $0x98] sm:$0xff]
  %v1080 = vld [vmem:[%s5 + $0xa0] sm:$0xff]
  %v1081 = vld [vmem:[%s5 + $0xa8] sm:$0xff]
  %v1082 = vld [vmem:[%s5 + $0xb0] sm:$0xff]
  %v1083 = vld [vmem:[%s5 + $0xb8] sm:$0xff]
  %v1084 = vld [vmem:[%s5 + $0xc0] sm:$0xff]
  %v1085 = vld [vmem:[%s5 + $0xc8] sm:$0xff]
  %v1086 = vld [vmem:[%s5 + $0xd0] sm:$0xff]
  %v1087 = vld [vmem:[%s5 + $0xd8] sm:$0xff]
  %v1088 = vld [vmem:[%s5 + $0xe0] sm:$0xff]
  %v1089 = vld [vmem:[%s5 + $0xe8] sm:$0xff]
  %v1090 = vld [vmem:[%s5 + $0xf0] sm:$0xff]
  %v1091 = vld [vmem:[%s5 + $0xf8] sm:$0xff]
  %v1092 = vld [vmem:[%s5 + $0x100] sm:$0xff]
  %v1093 = vld [vmem:[%s5 + $0x108] sm:$0xff]
  %v1094 = vld [vmem:[%s5 + $0x110] sm:$0xff]
  %v1095 = vld [vmem:[%s5 + $0x118] sm:$0xff]
  %v1096 = vld [vmem:[%s5 + $0x120] sm:$0xff]
  %v1097 = vld [vmem:[%s5 + $0x128] sm:$0xff]
  %v1098 = vld [vmem:[%s5 + $0x130] sm:$0xff]
  %v1099 = vld [vmem:[%s5 + $0x138] sm:$0xff]
  %v1100 = vld [vmem:[%s5 + $0x140] sm:$0xff]
  %v1101 = vld [vmem:[%s5 + $0x148] sm:$0xff]
  %v1102 = vld [vmem:[%s5 + $0x150] sm:$0xff]
  %v1103 = vld [vmem:[%s5 + $0x158] sm:$0xff]
  %v1104 = vld [vmem:[%s5 + $0x160] sm:$0xff]
  %v1105 = vld [vmem:[%s5 + $0x168] sm:$0xff]
  %v1106 = vld [vmem:[%s5 + $0x170] sm:$0xff]
  %v1107 = vld [vmem:[%s5 + $0x178] sm:$0xff]
  %v1108 = vld [vmem:[%s5 + $0x180] sm:$0xff]
  %v1109 = vld [vmem:[%s5 + $0x188] sm:$0xff]
  %v1110 = vld [vmem:[%s5 + $0x190] sm:$0xff]
  %v1111 = vld [vmem:[%s5 + $0x198] sm:$0xff]
  %v1112 = vld [vmem:[%s5 + $0x1a0] sm:$0xff]
  %v1113 = vld [vmem:[%s5 + $0x1a8] sm:$0xff]
  %v1114 = vld [vmem:[%s5 + $0x1b0] sm:$0xff]
  %v1115 = vld [vmem:[%s5 + $0x1b8] sm:$0xff]
  %v1116 = vld [vmem:[%s5 + $0x1c0] sm:$0xff]
  %v1117 = vld [vmem:[%s5 + $0x1c8] sm:$0xff]
  %v1118 = vld [vmem:[%s5 + $0x1d0] sm:$0xff]
  %v1119 = vld [vmem:[%s5 + $0x1d8] sm:$0xff]
  %v1120 = vld [vmem:[%s5 + $0x1e0] sm:$0xff]
  %v1121 = vld [vmem:[%s5 + $0x1e8] sm:$0xff]
  %v1122 = vld [vmem:[%s5 + $0x1f0] sm:$0xff]
  %v1123 = vld [vmem:[%s5 + $0x1f8] sm:$0xff]
  %v1124 = vld [vmem:[%s6] sm:$0xff]
  %v1125 = vld [vmem:[%s6 + $0x8] sm:$0xff]
  %v1126 = vld [vmem:[%s6 + $0x10] sm:$0xff]
  %v1127 = vld [vmem:[%s6 + $0x18] sm:$0xff]
  %v1128 = vld [vmem:[%s6 + $0x20] sm:$0xff]
  %v1129 = vld [vmem:[%s6 + $0x28] sm:$0xff]
  %v1130 = vld [vmem:[%s6 + $0x30] sm:$0xff]
  %v1131 = vld [vmem:[%s6 + $0x38] sm:$0xff]
  %v1132 = vld [vmem:[%s6 + $0x40] sm:$0xff]
  %v1133 = vld [vmem:[%s6 + $0x48] sm:$0xff]
  %v1134 = vld [vmem:[%s6 + $0x50] sm:$0xff]
  %v1135 = vld [vmem:[%s6 + $0x58] sm:$0xff]
  %v1136 = vld [vmem:[%s6 + $0x60] sm:$0xff]
  %v1137 = vld [vmem:[%s6 + $0x68] sm:$0xff]
  %v1138 = vld [vmem:[%s6 + $0x70] sm:$0xff]
  %v1139 = vld [vmem:[%s6 + $0x78] sm:$0xff]
  %v1140 = vld [vmem:[%s6 + $0x80] sm:$0xff]
  %v1141 = vld [vmem:[%s6 + $0x88] sm:$0xff]
  %v1142 = vld [vmem:[%s6 + $0x90] sm:$0xff]
  %v1143 = vld [vmem:[%s6 + $0x98] sm:$0xff]
  %v1144 = vld [vmem:[%s6 + $0xa0] sm:$0xff]
  %v1145 = vld [vmem:[%s6 + $0xa8] sm:$0xff]
  %v1146 = vld [vmem:[%s6 + $0xb0] sm:$0xff]
  %v1147 = vld [vmem:[%s6 + $0xb8] sm:$0xff]
  %v1148 = vld [vmem:[%s6 + $0xc0] sm:$0xff]
  %v1149 = vld [vmem:[%s6 + $0xc8] sm:$0xff]
  %v1150 = vld [vmem:[%s6 + $0xd0] sm:$0xff]
  %v1151 = vld [vmem:[%s6 + $0xd8] sm:$0xff]
  %v1152 = vld [vmem:[%s6 + $0xe0] sm:$0xff]
  %v1153 = vld [vmem:[%s6 + $0xe8] sm:$0xff]
  %v1154 = vld [vmem:[%s6 + $0xf0] sm:$0xff]
  %v1155 = vld [vmem:[%s6 + $0xf8] sm:$0xff]
  %1157 = vset.pattern.permute.xlu0 0
  %1158 = vperm.xlu0 %1157, %v1124
  %v1159 = vpop.permute.xlu0 %1158
  %1162 = vset.pattern.permute.xlu0 0
  %1163 = vperm.xlu0 %1162, %v1125
  %v1164 = vpop.permute.xlu0 %1163
  %1167 = vset.pattern.permute.xlu0 0
  %1168 = vperm.xlu0 %1167, %v1126
  %v1169 = vpop.permute.xlu0 %1168
  %1172 = vset.pattern.permute.xlu0 0
  %1173 = vperm.xlu0 %1172, %v1127
  %v1174 = vpop.permute.xlu0 %1173
  %1177 = vset.pattern.permute.xlu0 0
  %1178 = vperm.xlu0 %1177, %v1128
  %v1179 = vpop.permute.xlu0 %1178
  %1182 = vset.pattern.permute.xlu0 0
  %1183 = vperm.xlu0 %1182, %v1129
  %v1184 = vpop.permute.xlu0 %1183
  %1187 = vset.pattern.permute.xlu0 0
  %1188 = vperm.xlu0 %1187, %v1130
  %v1189 = vpop.permute.xlu0 %1188
  %1192 = vset.pattern.permute.xlu0 0
  %1193 = vperm.xlu0 %1192, %v1131
  %v1194 = vpop.permute.xlu0 %1193
  %1197 = vset.pattern.permute.xlu0 0
  %1198 = vperm.xlu0 %1197, %v1132
  %v1199 = vpop.permute.xlu0 %1198
  %1202 = vset.pattern.permute.xlu0 0
  %1203 = vperm.xlu0 %1202, %v1133
  %v1204 = vpop.permute.xlu0 %1203
  %1207 = vset.pattern.permute.xlu0 0
  %1208 = vperm.xlu0 %1207, %v1134
  %v1209 = vpop.permute.xlu0 %1208
  %1212 = vset.pattern.permute.xlu0 0
  %1213 = vperm.xlu0 %1212, %v1135
  %v1214 = vpop.permute.xlu0 %1213
  %1217 = vset.pattern.permute.xlu0 0
  %1218 = vperm.xlu0 %1217, %v1136
  %v1219 = vpop.permute.xlu0 %1218
  %1222 = vset.pattern.permute.xlu0 0
  %1223 = vperm.xlu0 %1222, %v1137
  %v1224 = vpop.permute.xlu0 %1223
  %1227 = vset.pattern.permute.xlu0 0
  %1228 = vperm.xlu0 %1227, %v1138
  %v1229 = vpop.permute.xlu0 %1228
  %1232 = vset.pattern.permute.xlu0 0
  %1233 = vperm.xlu0 %1232, %v1139
  %v1234 = vpop.permute.xlu0 %1233
  %1237 = vset.pattern.permute.xlu0 0
  %1238 = vperm.xlu0 %1237, %v1140
  %v1239 = vpop.permute.xlu0 %1238
  %1242 = vset.pattern.permute.xlu0 0
  %1243 = vperm.xlu0 %1242, %v1141
  %v1244 = vpop.permute.xlu0 %1243
  %1247 = vset.pattern.permute.xlu0 0
  %1248 = vperm.xlu0 %1247, %v1142
  %v1249 = vpop.permute.xlu0 %1248
  %1252 = vset.pattern.permute.xlu0 0
  %1253 = vperm.xlu0 %1252, %v1143
  %v1254 = vpop.permute.xlu0 %1253
  %1257 = vset.pattern.permute.xlu0 0
  %1258 = vperm.xlu0 %1257, %v1144
  %v1259 = vpop.permute.xlu0 %1258
  %1262 = vset.pattern.permute.xlu0 0
  %1263 = vperm.xlu0 %1262, %v1145
  %v1264 = vpop.permute.xlu0 %1263
  %1267 = vset.pattern.permute.xlu0 0
  %1268 = vperm.xlu0 %1267, %v1146
  %v1269 = vpop.permute.xlu0 %1268
  %1272 = vset.pattern.permute.xlu0 0
  %1273 = vperm.xlu0 %1272, %v1147
  %v1274 = vpop.permute.xlu0 %1273
  %1277 = vset.pattern.permute.xlu0 0
  %1278 = vperm.xlu0 %1277, %v1148
  %v1279 = vpop.permute.xlu0 %1278
  %1282 = vset.pattern.permute.xlu0 0
  %1283 = vperm.xlu0 %1282, %v1149
  %v1284 = vpop.permute.xlu0 %1283
  %1287 = vset.pattern.permute.xlu0 0
  %1288 = vperm.xlu0 %1287, %v1150
  %v1289 = vpop.permute.xlu0 %1288
  %1292 = vset.pattern.permute.xlu0 0
  %1293 = vperm.xlu0 %1292, %v1151
  %v1294 = vpop.permute.xlu0 %1293
  %1297 = vset.pattern.permute.xlu0 0
  %1298 = vperm.xlu0 %1297, %v1152
  %v1299 = vpop.permute.xlu0 %1298
  %1302 = vset.pattern.permute.xlu0 0
  %1303 = vperm.xlu0 %1302, %v1153
  %v1304 = vpop.permute.xlu0 %1303
  %1307 = vset.pattern.permute.xlu0 0
  %1308 = vperm.xlu0 %1307, %v1154
  %v1309 = vpop.permute.xlu0 %1308
  %1312 = vset.pattern.permute.xlu0 0
  %1313 = vperm.xlu0 %1312, %v1155
  %v1314 = vpop.permute.xlu0 %1313
  %1316 = vmatprep.subr.mxu0 0.0
  %1317 = vmatpush1.msra.mxu0 %v1028
  %1318 = vmatprep.subr.mxu0 0.0
  %1319 = vmatpush1.msra.mxu0 %v1029
  %1320 = vmatprep.subr.mxu0 0.0
  %1321 = vmatpush1.msra.mxu0 %v1030
  %1322 = vmatprep.subr.mxu0 0.0
  %1323 = vmatpush1.msra.mxu0 %v1031
  %1324 = vmatprep.subr.mxu0 0.0
  %1325 = vmatpush1.msra.mxu0 %v1032
  %1326 = vmatprep.subr.mxu0 0.0
  %1327 = vmatpush1.msra.mxu0 %v1033
  %1328 = vmatprep.subr.mxu0 0.0
  %1329 = vmatpush1.msra.mxu0 %v1034
  %1330 = vmatprep.subr.mxu0 0.0
  %1331 = vmatpush1.msra.mxu0 %v1035
  %1332 = vmatprep.subr.mxu0 0.0
  %1333 = vmatpush1.msra.mxu0 %v1036
  %1334 = vmatprep.subr.mxu0 0.0
  %1335 = vmatpush1.msra.mxu0 %v1037
  %1336 = vmatprep.subr.mxu0 0.0
  %1337 = vmatpush1.msra.mxu0 %v1038
  %1338 = vmatprep.subr.mxu0 0.0
  %1339 = vmatpush1.msra.mxu0 %v1039
  %1340 = vmatprep.subr.mxu0 0.0
  %1341 = vmatpush1.msra.mxu0 %v1040
  %1342 = vmatprep.subr.mxu0 0.0
  %1343 = vmatpush1.msra.mxu0 %v1041
  %1344 = vmatprep.subr.mxu0 0.0
  %1345 = vmatpush1.msra.mxu0 %v1042
  %1346 = vmatprep.subr.mxu0 0.0
  %1347 = vmatpush1.msra.mxu0 %v1043
  %1348 = vmatprep.subr.mxu0 0.0
  %1349 = vmatpush1.msra.mxu0 %v1044
  %1350 = vmatprep.subr.mxu0 0.0
  %1351 = vmatpush1.msra.mxu0 %v1045
  %1352 = vmatprep.subr.mxu0 0.0
  %1353 = vmatpush1.msra.mxu0 %v1046
  %1354 = vmatprep.subr.mxu0 0.0
  %1355 = vmatpush1.msra.mxu0 %v1047
  %1356 = vmatprep.subr.mxu0 0.0
  %1357 = vmatpush1.msra.mxu0 %v1048
  %1358 = vmatprep.subr.mxu0 0.0
  %1359 = vmatpush1.msra.mxu0 %v1049
  %1360 = vmatprep.subr.mxu0 0.0
  %1361 = vmatpush1.msra.mxu0 %v1050
  %1362 = vmatprep.subr.mxu0 0.0
  %1363 = vmatpush1.msra.mxu0 %v1051
  %1364 = vmatprep.subr.mxu0 0.0
  %1365 = vmatpush1.msra.mxu0 %v1052
  %1366 = vmatprep.subr.mxu0 0.0
  %1367 = vmatpush1.msra.mxu0 %v1053
  %1368 = vmatprep.subr.mxu0 0.0
  %1369 = vmatpush1.msra.mxu0 %v1054
  %1370 = vmatprep.subr.mxu0 0.0
  %1371 = vmatpush1.msra.mxu0 %v1055
  %1372 = vmatprep.subr.mxu0 0.0
  %1373 = vmatpush1.msra.mxu0 %v1056
  %1374 = vmatprep.subr.mxu0 0.0
  %1375 = vmatpush1.msra.mxu0 %v1057
  %1376 = vmatprep.subr.mxu0 0.0
  %1377 = vmatpush1.msra.mxu0 %v1058
  %1378 = vmatprep.subr.mxu0 0.0
  %1379 = vmatpush1.msra.mxu0 %v1059
  %1380 = vmatprep.mubr.f32.mxu0 %v1061
  %1381 = vmatmul.mubr.f32.gmra.mrb[0].mxu0 %v1060
  %v1382 = vpop.f32.mrb[0].mxu0
  %v1383 = vadd.f32 %v1159, %v1382
  %v1384 = vpop.f32.mrb[0].mxu0
  %1385 = vmatprep.mubr.f32.mxu0 %v1063
  %1386 = vmatmul.mubr.f32.gmra.mrb[0].mxu0 %v1062
  %v1387 = vpop.f32.mrb[0].mxu0
  %v1388 = vadd.f32 %v1164, %v1387
  %v1389 = vpop.f32.mrb[0].mxu0
  %1390 = vmatprep.mubr.f32.mxu0 %v1065
  %1391 = vmatmul.mubr.f32.gmra.mrb[0].mxu0 %v1064
  %v1392 = vpop.f32.mrb[0].mxu0
  %v1393 = vadd.f32 %v1169, %v1392
  %v1394 = vpop.f32.mrb[0].mxu0
  %1395 = vmatprep.mubr.f32.mxu0 %v1067
  %1396 = vmatmul.mubr.f32.gmra.mrb[0].mxu0 %v1066
  %v1397 = vpop.f32.mrb[0].mxu0
  %v1398 = vadd.f32 %v1174, %v1397
  %v1399 = vpop.f32.mrb[0].mxu0
  %1400 = vmatprep.mubr.f32.mxu0 %v1069
  %1401 = vmatmul.mubr.f32.gmra.mrb[0].mxu0 %v1068
  %v1402 = vpop.f32.mrb[0].mxu0
  %v1403 = vadd.f32 %v1179, %v1402
  %v1404 = vpop.f32.mrb[0].mxu0
  %1405 = vmatprep.mubr.f32.mxu0 %v1071
  %1406 = vmatmul.mubr.f32.gmra.mrb[0].mxu0 %v1070
  %v1407 = vpop.f32.mrb[0].mxu0
  %v1408 = vadd.f32 %v1184, %v1407
  %v1409 = vpop.f32.mrb[0].mxu0
  %1410 = vmatprep.mubr.f32.mxu0 %v1073
  %1411 = vmatmul.mubr.f32.gmra.mrb[0].mxu0 %v1072
  %v1412 = vpop.f32.mrb[0].mxu0
  %v1413 = vadd.f32 %v1189, %v1412
  %v1414 = vpop.f32.mrb[0].mxu0
  %1415 = vmatprep.mubr.f32.mxu0 %v1075
  %1416 = vmatmul.mubr.f32.gmra.mrb[0].mxu0 %v1074
  %v1417 = vpop.f32.mrb[0].mxu0
  %v1418 = vadd.f32 %v1194, %v1417
  %v1419 = vpop.f32.mrb[0].mxu0
  %1420 = vmatprep.mubr.f32.mxu0 %v1077
  %1421 = vmatmul.mubr.f32.gmra.mrb[0].mxu0 %v1076
  %v1422 = vpop.f32.mrb[0].mxu0
  %v1423 = vadd.f32 %v1199, %v1422
  %v1424 = vpop.f32.mrb[0].mxu0
  %1425 = vmatprep.mubr.f32.mxu0 %v1079
  %1426 = vmatmul.mubr.f32.gmra.mrb[0].mxu0 %v1078
  %v1427 = vpop.f32.mrb[0].mxu0
  %v1428 = vadd.f32 %v1204, %v1427
  %v1429 = vpop.f32.mrb[0].mxu0
  %1430 = vmatprep.mubr.f32.mxu0 %v1081
  %1431 = vmatmul.mubr.f32.gmra.mrb[0].mxu0 %v1080
  %v1432 = vpop.f32.mrb[0].mxu0
  %v1433 = vadd.f32 %v1209, %v1432
  %v1434 = vpop.f32.mrb[0].mxu0
  %1435 = vmatprep.mubr.f32.mxu0 %v1083
  %1436 = vmatmul.mubr.f32.gmra.mrb[0].mxu0 %v1082
  %v1437 = vpop.f32.mrb[0].mxu0
  %v1438 = vadd.f32 %v1214, %v1437
  %v1439 = vpop.f32.mrb[0].mxu0
  %1440 = vmatprep.mubr.f32.mxu0 %v1085
  %1441 = vmatmul.mubr.f32.gmra.mrb[0].mxu0 %v1084
  %v1442 = vpop.f32.mrb[0].mxu0
  %v1443 = vadd.f32 %v1219, %v1442
  %v1444 = vpop.f32.mrb[0].mxu0
  %1445 = vmatprep.mubr.f32.mxu0 %v1087
  %1446 = vmatmul.mubr.f32.gmra.mrb[0].mxu0 %v1086
  %v1447 = vpop.f32.mrb[0].mxu0
  %v1448 = vadd.f32 %v1224, %v1447
  %v1449 = vpop.f32.mrb[0].mxu0
  %1450 = vmatprep.mubr.f32.mxu0 %v1089
  %1451 = vmatmul.mubr.f32.gmra.mrb[0].mxu0 %v1088
  %v1452 = vpop.f32.mrb[0].mxu0
  %v1453 = vadd.f32 %v1229, %v1452
  %v1454 = vpop.f32.mrb[0].mxu0
  %1455 = vmatprep.mubr.f32.mxu0 %v1091
  %1456 = vmatmul.mubr.f32.gmra.mrb[0].mxu0 %v1090
  %v1457 = vpop.f32.mrb[0].mxu0
  %v1458 = vadd.f32 %v1234, %v1457
  %v1459 = vpop.f32.mrb[0].mxu0
  %1460 = vmatprep.mubr.f32.mxu0 %v1093
  %1461 = vmatmul.mubr.f32.gmra.mrb[0].mxu0 %v1092
  %v1462 = vpop.f32.mrb[0].mxu0
  %v1463 = vadd.f32 %v1239, %v1462
  %v1464 = vpop.f32.mrb[0].mxu0
  %1465 = vmatprep.mubr.f32.mxu0 %v1095
  %1466 = vmatmul.mubr.f32.gmra.mrb[0].mxu0 %v1094
  %v1467 = vpop.f32.mrb[0].mxu0
  %v1468 = vadd.f32 %v1244, %v1467
  %v1469 = vpop.f32.mrb[0].mxu0
  %1470 = vmatprep.mubr.f32.mxu0 %v1097
  %1471 = vmatmul.mubr.f32.gmra.mrb[0].mxu0 %v1096
  %v1472 = vpop.f32.mrb[0].mxu0
  %v1473 = vadd.f32 %v1249, %v1472
  %v1474 = vpop.f32.mrb[0].mxu0
  %1475 = vmatprep.mubr.f32.mxu0 %v1099
  %1476 = vmatmul.mubr.f32.gmra.mrb[0].mxu0 %v1098
  %v1477 = vpop.f32.mrb[0].mxu0
  %v1478 = vadd.f32 %v1254, %v1477
  %v1479 = vpop.f32.mrb[0].mxu0
  %1480 = vmatprep.mubr.f32.mxu0 %v1101
  %1481 = vmatmul.mubr.f32.gmra.mrb[0].mxu0 %v1100
  %v1482 = vpop.f32.mrb[0].mxu0
  %v1483 = vadd.f32 %v1259, %v1482
  %v1484 = vpop.f32.mrb[0].mxu0
  %1485 = vmatprep.mubr.f32.mxu0 %v1103
  %1486 = vmatmul.mubr.f32.gmra.mrb[0].mxu0 %v1102
  %v1487 = vpop.f32.mrb[0].mxu0
  %v1488 = vadd.f32 %v1264, %v1487
  %v1489 = vpop.f32.mrb[0].mxu0
  %1490 = vmatprep.mubr.f32.mxu0 %v1105
  %1491 = vmatmul.mubr.f32.gmra.mrb[0].mxu0 %v1104
  %v1492 = vpop.f32.mrb[0].mxu0
  %v1493 = vadd.f32 %v1269, %v1492
  %v1494 = vpop.f32.mrb[0].mxu0
  %1495 = vmatprep.mubr.f32.mxu0 %v1107
  %1496 = vmatmul.mubr.f32.gmra.mrb[0].mxu0 %v1106
  %v1497 = vpop.f32.mrb[0].mxu0
  %v1498 = vadd.f32 %v1274, %v1497
  %v1499 = vpop.f32.mrb[0].mxu0
  %1500 = vmatprep.mubr.f32.mxu0 %v1109
  %1501 = vmatmul.mubr.f32.gmra.mrb[0].mxu0 %v1108
  %v1502 = vpop.f32.mrb[0].mxu0
  %v1503 = vadd.f32 %v1279, %v1502
  %v1504 = vpop.f32.mrb[0].mxu0
  %1505 = vmatprep.mubr.f32.mxu0 %v1111
  %1506 = vmatmul.mubr.f32.gmra.mrb[0].mxu0 %v1110
  %v1507 = vpop.f32.mrb[0].mxu0
  %v1508 = vadd.f32 %v1284, %v1507
  %v1509 = vpop.f32.mrb[0].mxu0
  %1510 = vmatprep.mubr.f32.mxu0 %v1113
  %1511 = vmatmul.mubr.f32.gmra.mrb[0].mxu0 %v1112
  %v1512 = vpop.f32.mrb[0].mxu0
  %v1513 = vadd.f32 %v1289, %v1512
  %v1514 = vpop.f32.mrb[0].mxu0
  %1515 = vmatprep.mubr.f32.mxu0 %v1115
  %1516 = vmatmul.mubr.f32.gmra.mrb[0].mxu0 %v1114
  %v1517 = vpop.f32.mrb[0].mxu0
  %v1518 = vadd.f32 %v1294, %v1517
  %v1519 = vpop.f32.mrb[0].mxu0
  %1520 = vmatprep.mubr.f32.mxu0 %v1117
  %1521 = vmatmul.mubr.f32.gmra.mrb[0].mxu0 %v1116
  %v1522 = vpop.f32.mrb[0].mxu0
  %v1523 = vadd.f32 %v1299, %v1522
  %v1524 = vpop.f32.mrb[0].mxu0
  %1525 = vmatprep.mubr.f32.mxu0 %v1119
  %1526 = vmatmul.mubr.f32.gmra.mrb[0].mxu0 %v1118
  %v1527 = vpop.f32.mrb[0].mxu0
  %v1528 = vadd.f32 %v1304, %v1527
  %v1529 = vpop.f32.mrb[0].mxu0
  %1530 = vmatprep.mubr.f32.mxu0 %v1121
  %1531 = vmatmul.mubr.f32.gmra.mrb[0].mxu0 %v1120
  %v1532 = vpop.f32.mrb[0].mxu0
  %v1533 = vadd.f32 %v1309, %v1532
  %v1534 = vpop.f32.mrb[0].mxu0
  %1535 = vmatprep.mubr.f32.mxu0 %v1123
  %1536 = vmatmul.mubr.f32.gmra.mrb[0].mxu0 %v1122
  %v1537 = vpop.f32.mrb[0].mxu0
  %v1538 = vadd.f32 %v1314, %v1537
  %v1539 = vpop.f32.mrb[0].mxu0
  %1540 = vdwg.mxu0
  %vm1541 = vcmp.gt.f32.partialorder %v1383, 0.0
  %vm1542 = vcmp.gt.f32.partialorder %v1388, 0.0
  %vm1543 = vcmp.gt.f32.partialorder %v1393, 0.0
  %vm1544 = vcmp.gt.f32.partialorder %v1398, 0.0
  %vm1545 = vcmp.gt.f32.partialorder %v1403, 0.0
  %vm1546 = vcmp.gt.f32.partialorder %v1408, 0.0
  %vm1547 = vcmp.gt.f32.partialorder %v1413, 0.0
  %vm1548 = vcmp.gt.f32.partialorder %v1418, 0.0
  %vm1549 = vcmp.gt.f32.partialorder %v1423, 0.0
  %vm1550 = vcmp.gt.f32.partialorder %v1428, 0.0
  %vm1551 = vcmp.gt.f32.partialorder %v1433, 0.0
  %vm1552 = vcmp.gt.f32.partialorder %v1438, 0.0
  %vm1553 = vcmp.gt.f32.partialorder %v1443, 0.0
  %vm1554 = vcmp.gt.f32.partialorder %v1448, 0.0
  %vm1555 = vcmp.gt.f32.partialorder %v1453, 0.0
  %vm1556 = vcmp.gt.f32.partialorder %v1458, 0.0
  %vm1557 = vcmp.gt.f32.partialorder %v1463, 0.0
  %vm1558 = vcmp.gt.f32.partialorder %v1468, 0.0
  %vm1559 = vcmp.gt.f32.partialorder %v1473, 0.0
  %vm1560 = vcmp.gt.f32.partialorder %v1478, 0.0
  %vm1561 = vcmp.gt.f32.partialorder %v1483, 0.0
  %vm1562 = vcmp.gt.f32.partialorder %v1488, 0.0
  %vm1563 = vcmp.gt.f32.partialorder %v1493, 0.0
  %vm1564 = vcmp.gt.f32.partialorder %v1498, 0.0
  %vm1565 = vcmp.gt.f32.partialorder %v1503, 0.0
  %vm1566 = vcmp.gt.f32.partialorder %v1508, 0.0
  %vm1567 = vcmp.gt.f32.partialorder %v1513, 0.0
  %vm1568 = vcmp.gt.f32.partialorder %v1518, 0.0
  %vm1569 = vcmp.gt.f32.partialorder %v1523, 0.0
  %vm1570 = vcmp.gt.f32.partialorder %v1528, 0.0
  %vm1571 = vcmp.gt.f32.partialorder %v1533, 0.0
  %vm1572 = vcmp.gt.f32.partialorder %v1538, 0.0
  %v1573 = vmul.f32 %v1383, 0.2
  %v1574 = vmul.f32 %v1388, 0.2
  %v1575 = vmul.f32 %v1393, 0.2
  %v1576 = vmul.f32 %v1398, 0.2
  %v1577 = vmul.f32 %v1403, 0.2
  %v1578 = vmul.f32 %v1408, 0.2
  %v1579 = vmul.f32 %v1413, 0.2
  %v1580 = vmul.f32 %v1418, 0.2
  %v1581 = vmul.f32 %v1423, 0.2
  %v1582 = vmul.f32 %v1428, 0.2
  %v1583 = vmul.f32 %v1433, 0.2
  %v1584 = vmul.f32 %v1438, 0.2
  %v1585 = vmul.f32 %v1443, 0.2
  %v1586 = vmul.f32 %v1448, 0.2
  %v1587 = vmul.f32 %v1453, 0.2
  %v1588 = vmul.f32 %v1458, 0.2
  %v1589 = vmul.f32 %v1463, 0.2
  %v1590 = vmul.f32 %v1468, 0.2
  %v1591 = vmul.f32 %v1473, 0.2
  %v1592 = vmul.f32 %v1478, 0.2
  %v1593 = vmul.f32 %v1483, 0.2
  %v1594 = vmul.f32 %v1488, 0.2
  %v1595 = vmul.f32 %v1493, 0.2
  %v1596 = vmul.f32 %v1498, 0.2
  %v1597 = vmul.f32 %v1503, 0.2
  %v1598 = vmul.f32 %v1508, 0.2
  %v1599 = vmul.f32 %v1513, 0.2
  %v1600 = vmul.f32 %v1518, 0.2
  %v1601 = vmul.f32 %v1523, 0.2
  %v1602 = vmul.f32 %v1528, 0.2
  %v1603 = vmul.f32 %v1533, 0.2
  %v1604 = vmul.f32 %v1538, 0.2
  %v1605 = vsel %vm1541, %v1383, %v1573
  %v1606 = vsel %vm1542, %v1388, %v1574
  %v1607 = vsel %vm1543, %v1393, %v1575
  %v1608 = vsel %vm1544, %v1398, %v1576
  %v1609 = vsel %vm1545, %v1403, %v1577
  %v1610 = vsel %vm1546, %v1408, %v1578
  %v1611 = vsel %vm1547, %v1413, %v1579
  %v1612 = vsel %vm1548, %v1418, %v1580
  %v1613 = vsel %vm1549, %v1423, %v1581
  %v1614 = vsel %vm1550, %v1428, %v1582
  %v1615 = vsel %vm1551, %v1433, %v1583
  %v1616 = vsel %vm1552, %v1438, %v1584
  %v1617 = vsel %vm1553, %v1443, %v1585
  %v1618 = vsel %vm1554, %v1448, %v1586
  %v1619 = vsel %vm1555, %v1453, %v1587
  %v1620 = vsel %vm1556, %v1458, %v1588
  %v1621 = vsel %vm1557, %v1463, %v1589
  %v1622 = vsel %vm1558, %v1468, %v1590
  %v1623 = vsel %vm1559, %v1473, %v1591
  %v1624 = vsel %vm1560, %v1478, %v1592
  %v1625 = vsel %vm1561, %v1483, %v1593
  %v1626 = vsel %vm1562, %v1488, %v1594
  %v1627 = vsel %vm1563, %v1493, %v1595
  %v1628 = vsel %vm1564, %v1498, %v1596
  %v1629 = vsel %vm1565, %v1503, %v1597
  %v1630 = vsel %vm1566, %v1508, %v1598
  %v1631 = vsel %vm1567, %v1513, %v1599
  %v1632 = vsel %vm1568, %v1518, %v1600
  %v1633 = vsel %vm1569, %v1523, %v1601
  %v1634 = vsel %vm1570, %v1528, %v1602
  %v1635 = vsel %vm1571, %v1533, %v1603
  %v1636 = vsel %vm1572, %v1538, %v1604
  %v1637 = vld [vmem:[%s7] sm:$0x3]
  %v1639 = vlaneseq
  %v1640 = vshrl.u32 %v1639, 7
  %v1641 = vsub.s32 0, %v1640
  %v1642 = vrot.slane %v1637, %v1641
  %v1643 = vlaneseq
  %v1644 = vshrl.u32 %v1643, 7
  %v1645 = vsub.s32 1, %v1644
  %v1646 = vrot.slane %v1637, %v1645
  %1649 = vmatprep.subr.mxu0 0.0
  %1650 = vmatpush1.msra.mxu0 %v1605
  %1651 = vmatprep.subr.mxu0 0.0
  %1652 = vmatpush1.msra.mxu0 %v1606
  %1653 = vmatprep.subr.mxu0 0.0
  %1654 = vmatpush1.msra.mxu0 %v1607
  %1655 = vmatprep.subr.mxu0 0.0
  %1656 = vmatpush1.msra.mxu0 %v1608
  %1657 = vmatprep.subr.mxu0 0.0
  %1658 = vmatpush1.msra.mxu0 %v1609
  %1659 = vmatprep.subr.mxu0 0.0
  %1660 = vmatpush1.msra.mxu0 %v1610
  %1661 = vmatprep.subr.mxu0 0.0
  %1662 = vmatpush1.msra.mxu0 %v1611
  %1663 = vmatprep.subr.mxu0 0.0
  %1664 = vmatpush1.msra.mxu0 %v1612
  %1665 = vmatprep.subr.mxu0 0.0
  %1666 = vmatpush1.msra.mxu0 %v1613
  %1667 = vmatprep.subr.mxu0 0.0
  %1668 = vmatpush1.msra.mxu0 %v1614
  %1669 = vmatprep.subr.mxu0 0.0
  %1670 = vmatpush1.msra.mxu0 %v1615
  %1671 = vmatprep.subr.mxu0 0.0
  %1672 = vmatpush1.msra.mxu0 %v1616
  %1673 = vmatprep.subr.mxu0 0.0
  %1674 = vmatpush1.msra.mxu0 %v1617
  %1675 = vmatprep.subr.mxu0 0.0
  %1676 = vmatpush1.msra.mxu0 %v1618
  %1677 = vmatprep.subr.mxu0 0.0
  %1678 = vmatpush1.msra.mxu0 %v1619
  %1679 = vmatprep.subr.mxu0 0.0
  %1680 = vmatpush1.msra.mxu0 %v1620
  %1681 = vmatprep.subr.mxu0 0.0
  %1682 = vmatpush1.msra.mxu0 %v1621
  %1683 = vmatprep.subr.mxu0 0.0
  %1684 = vmatpush1.msra.mxu0 %v1622
  %1685 = vmatprep.subr.mxu0 0.0
  %1686 = vmatpush1.msra.mxu0 %v1623
  %1687 = vmatprep.subr.mxu0 0.0
  %1688 = vmatpush1.msra.mxu0 %v1624
  %1689 = vmatprep.subr.mxu0 0.0
  %1690 = vmatpush1.msra.mxu0 %v1625
  %1691 = vmatprep.subr.mxu0 0.0
  %1692 = vmatpush1.msra.mxu0 %v1626
  %1693 = vmatprep.subr.mxu0 0.0
  %1694 = vmatpush1.msra.mxu0 %v1627
  %1695 = vmatprep.subr.mxu0 0.0
  %1696 = vmatpush1.msra.mxu0 %v1628
  %1697 = vmatprep.subr.mxu0 0.0
  %1698 = vmatpush1.msra.mxu0 %v1629
  %1699 = vmatprep.subr.mxu0 0.0
  %1700 = vmatpush1.msra.mxu0 %v1630
  %1701 = vmatprep.subr.mxu0 0.0
  %1702 = vmatpush1.msra.mxu0 %v1631
  %1703 = vmatprep.subr.mxu0 0.0
  %1704 = vmatpush1.msra.mxu0 %v1632
  %1705 = vmatprep.subr.mxu0 0.0
  %1706 = vmatpush1.msra.mxu0 %v1633
  %1707 = vmatprep.subr.mxu0 0.0
  %1708 = vmatpush1.msra.mxu0 %v1634
  %1709 = vmatprep.subr.mxu0 0.0
  %1710 = vmatpush1.msra.mxu0 %v1635
  %1711 = vmatprep.subr.mxu0 0.0
  %1712 = vmatpush1.msra.mxu0 %v1636
  %1713 = vmatprep.mubr.f32.mxu0 %v1646
  %1714 = vmatmul.mubr.f32.gmra.mrb[0].mxu0 %v1642
  %v1715 = vpop.f32.mrb[0].mxu0
  %v1716 = vadd.f32 0.0, %v1715
  %v1717 = vpop.f32.mrb[0].mxu0
  %1718 = vdwg.mxu0
  %1719 = vst [vmem:[%s8] sm:$0x1] %v1716
  // Predicated region
  $region34: #{qvalue_forward.1} parent=0 // pred_check
    _
  $region35: #{qvalue_forward.1} parent=0 // pred_check_branch
    %1721 = sbr.rel (0) target = $region37
  $region36: #{qvalue_forward.1} parent=0 // pred_region
    _
  $region37: #{qvalue_forward.1} parent=0 // pred_fallthru
    _
  // Predicated region
  $region38: #{qvalue_forward.1} parent=0 // pred_check
    _
  $region39: #{qvalue_forward.1} parent=0 // pred_check_branch
    %1723 = sbr.rel (0) target = $region41
  $region40: #{qvalue_forward.1} parent=0 // pred_region
    _
  $region41: #{qvalue_forward.1} parent=0 // pred_fallthru
    _

</llo_original>
